<compile_context>
chip_gen: v6e
topology: v6e:2x2x1
jax: 0.10.0
libtpu: 0.0.40
codegen_flags: <defaults>
</compile_context>

<pallas_src>
import functools

import jax
import jax.numpy as jnp
import numpy as np
from jax.experimental import pallas as pl
from jax.experimental.pallas import tpu as pltpu


_N_PAD = 128   # fc2 output lanes (action_space padded up to one full lane group)


# ----------------------------------------------------------------------------
# Fused kernel: conv1 -> relu -> conv2 -> relu -> fc1 -> relu -> fc2
# ----------------------------------------------------------------------------
def _dqn_fused_kernel(p1d_ref, w1_ref, b1_ref, w2_ref, b2_ref,
                      fc1w_ref, fc1b_ref, fc2w_ref, fc2b_ref, o_ref,
                      *, batch: int, npos: int):
    f32 = jnp.float32
    c1 = w1_ref.shape[1]           # conv1 out channels (16)
    c2 = w2_ref.shape[1]           # conv2 out channels (32)
    taps = w2_ref.shape[0] // c1   # conv2 kernel taps (4*4 = 16)
    rows2 = npos * batch           # conv2 output rows (= B * 2 * 2 = 8)

    # conv1: one MXU matmul over pre-gathered, lane-dense patches.
    # [taps*rows2, 256] @ [256, 16]
    y1 = jnp.dot(p1d_ref[...], w1_ref[...], preferred_element_type=f32)
    y1 = jnp.maximum(y1 + b1_ref[...], 0.0)

    # conv2: tap accumulation; each tap block is a contiguous, 8-row (sublane
    # aligned) slice of the conv1 output kept entirely on-chip.
    w2 = w2_ref[...]
    acc2 = jnp.zeros((rows2, c2), f32)
    for t in range(taps):
        acc2 = acc2 + jnp.dot(y1[t * rows2:(t + 1) * rows2, :],
                              w2[t * c1:(t + 1) * c1, :],
                              preferred_element_type=f32)
    y2 = jnp.maximum(acc2 + b2_ref[...], 0.0)           # [rows2, c2], row = pos*B + b

    # fc1: the NCHW flatten is absorbed by accumulating over the npos
    # (spatial-position) blocks of the permuted fc1 weight -> no concat/reshape.
    fc1w = fc1w_ref[...]                                 # [npos*c2, 256]
    h = jnp.zeros((batch, fc1w.shape[1]), f32)
    for p in range(npos):
        h = h + jnp.dot(y2[p * batch:(p + 1) * batch, :],
                        fc1w[p * c2:(p + 1) * c2, :],
                        preferred_element_type=f32)
    h = jnp.maximum(h + fc1b_ref[...], 0.0)              # [batch, 256]

    # fc2 (output padded to 128 lanes -> unmasked lane-dense store)
    out = jnp.dot(h, fc2w_ref[...], preferred_element_type=f32) + fc2b_ref[...]
    o_ref[...] = out.astype(o_ref.dtype)


# ----------------------------------------------------------------------------
# Wrapper: layout prep (trace-time XLA on tiny tensors) + single pallas_call
# ----------------------------------------------------------------------------
def dqn_cnn_forward(x_nhwc, params, *, actions: int):
    """x_nhwc: [B, H, W, frames] float32 -> [B, actions] Q-values."""
    B, H, W, F = x_nhwc.shape
    assert H % 4 == 0 and W % 4 == 0, "spatial dims must be divisible by stride 4"
    OH1, OW1 = (H - 8) // 4 + 1, (W - 8) // 4 + 1        # conv1 output spatial (7,7)
    OH2, OW2 = (OH1 - 4) // 2 + 1, (OW1 - 4) // 2 + 1    # conv2 output spatial (2,2)
    P = OH2 * OW2
    C1, C2 = params["w1"].shape[0], params["w2"].shape[0]
    NF1 = params["fc1_w"].shape[0]

    f32 = jnp.float32
    x = x_nhwc.astype(f32)

    # conv1 im2col: space-to-depth(4) then 4 contiguous taps (k=8,s=4 -> k=2,s=1).
    xs = x.reshape(B, H // 4, 4, W // 4, 4, F)
    xs = xs.transpose(0, 1, 3, 2, 4, 5).reshape(B, H // 4, W // 4, 16 * F)
    p1 = jnp.concatenate([xs[:, di:di + OH1, dj:dj + OW1, :]
                          for di in (0, 1) for dj in (0, 1)], axis=-1)  # [B,OH1,OW1,64F]

    # Duplicate conv1 patches into (conv2-tap, conv2-pos, batch) row order so
    # the kernel's conv2 im2col is purely contiguous row slices.
    ti, tj = np.divmod(np.arange(16), 4)        # conv2 tap (i, j)
    ph, pw = np.divmod(np.arange(P), OW2)       # conv2 output position (oh2, ow2)
    oh_idx = 2 * ph[None, :] + ti[:, None]      # [16, P]
    ow_idx = 2 * pw[None, :] + tj[:, None]      # [16, P]
    p1d = p1[:, oh_idx, ow_idx, :]                               # [B, 16, P, 64F]
    p1d = jnp.transpose(p1d, (1, 2, 0, 3)).reshape(16 * P * B, 64 * F)

    # One-time weight permutations (channels-last + NCHW flatten order absorbed).
    w1m = params["w1"].astype(f32).reshape(C1, F, 2, 4, 2, 4)
    w1m = w1m.transpose(2, 4, 3, 5, 1, 0).reshape(64 * F, C1)    # [256, 16]
    b1 = params["b1"].astype(f32).reshape(1, C1)
    w2m = params["w2"].astype(f32).transpose(2, 3, 1, 0).reshape(16 * C1, C2)  # [256, 32]
    b2 = params["b2"].astype(f32).reshape(1, C2)
    fc1wp = params["fc1_w"].astype(f32).reshape(NF1, C2, OH2, OW2)
    fc1wp = fc1wp.transpose(2, 3, 1, 0).reshape(P * C2, NF1)     # [128, 256]
    fc1b = params["fc1_b"].astype(f32).reshape(1, NF1)
    fc2wp = jnp.zeros((NF1, _N_PAD), f32).at[:, :actions].set(
        params["fc2_w"].astype(f32).T)                           # [256, 128] padded
    fc2b = jnp.zeros((1, _N_PAD), f32).at[0, :actions].set(params["fc2_b"].astype(f32))

    kernel = functools.partial(_dqn_fused_kernel, batch=B, npos=P)
    out = pl.pallas_call(
        kernel,
        out_shape=jax.ShapeDtypeStruct((B, _N_PAD), f32),
        in_specs=[pl.BlockSpec(memory_space=pltpu.MemorySpace.VMEM)] * 9,
        out_specs=pl.BlockSpec(memory_space=pltpu.MemorySpace.VMEM),
    )(p1d, w1m, b1, w2m, b2, fc1wp, fc1b, fc2wp, fc2b)
    # TODO(synk): for large batch/image sizes, add a "parallel" M-grid over
    # patch rows with explicit vmem_limit_bytes and cast MXU inputs to bf16.
    return out[:, :actions]


# ----------------------------------------------------------------------------
# Pure-JAX reference (correctness check only)
# ----------------------------------------------------------------------------
def dqn_cnn_reference(x_nhwc, params):
    x = jnp.transpose(x_nhwc, (0, 3, 1, 2)).astype(jnp.float32)

    def conv(x, w, b, s):
        y = jax.lax.conv_general_dilated(
            x, w.astype(jnp.float32), (s, s), "VALID",
            dimension_numbers=("NCHW", "OIHW", "NCHW"))
        return y + b[None, :, None, None]

    x = jax.nn.relu(conv(x, params["w1"], params["b1"], 4))
    x = jax.nn.relu(conv(x, params["w2"], params["b2"], 2))
    x = x.reshape(x.shape[0], -1)
    x = jax.nn.relu(x @ params["fc1_w"].T + params["fc1_b"])
    x = x @ params["fc2_w"].T + params["fc2_b"]
    return x


if __name__ == "__main__":
    # observation_space = (width=32, height=32, frames=4); action_space = 6
    B, H, W, FRAMES = 2, 32, 32, 4
    ACTIONS = 6
    # conv output: (32-8)//4+1 = 7  ->  (7-4)//2+1 = 2  ->  32*2*2 = 128
    CONV_OUT = 32 * 2 * 2

    key = jax.random.PRNGKey(0)
    ks = jax.random.split(key, 9)
    scale = 0.05
    params = {
        "w1": scale * jax.random.normal(ks[0], (16, FRAMES, 8, 8), jnp.float32),
        "b1": scale * jax.random.normal(ks[1], (16,), jnp.float32),
        "w2": scale * jax.random.normal(ks[2], (32, 16, 4, 4), jnp.float32),
        "b2": scale * jax.random.normal(ks[3], (32,), jnp.float32),
        "fc1_w": scale * jax.random.normal(ks[4], (256, CONV_OUT), jnp.float32),
        "fc1_b": scale * jax.random.normal(ks[5], (256,), jnp.float32),
        "fc2_w": scale * jax.random.normal(ks[6], (ACTIONS, 256), jnp.float32),
        "fc2_b": scale * jax.random.normal(ks[7], (ACTIONS,), jnp.float32),
    }
    x = jax.random.normal(ks[8], (B, H, W, FRAMES), jnp.float32)

    fwd = jax.jit(functools.partial(dqn_cnn_forward, actions=ACTIONS))
    out = jax.block_until_ready(fwd(x, params))
    ref = jax.block_until_ready(dqn_cnn_reference(x, params))

    assert out.shape == (B, ACTIONS), out.shape
    assert np.allclose(np.asarray(out), np.asarray(ref), atol=1e-4, rtol=1e-4), (
        np.max(np.abs(np.asarray(out) - np.asarray(ref))))
    print("KERNEL_OK")
</pallas_src>

<mosaic_0001>
module attributes {stable_mosaic.version = 11 : i64} {
  func.func @_dqn_fused_kernel(%arg0: memref<128x256xf32, #tpu.memory_space<vmem>>, %arg1: memref<256x16xf32, #tpu.memory_space<vmem>>, %arg2: memref<1x16xf32, #tpu.memory_space<vmem>>, %arg3: memref<256x32xf32, #tpu.memory_space<vmem>>, %arg4: memref<1x32xf32, #tpu.memory_space<vmem>>, %arg5: memref<128x256xf32, #tpu.memory_space<vmem>>, %arg6: memref<1x256xf32, #tpu.memory_space<vmem>>, %arg7: memref<256x128xf32, #tpu.memory_space<vmem>>, %arg8: memref<1x128xf32, #tpu.memory_space<vmem>>, %arg9: memref<2x128xf32, #tpu.memory_space<vmem>>) attributes {dimension_semantics = [], scalar_prefetch = 0 : i64, scratch_operands = 0 : i64, tpu.core_type = #tpu.core_type<tc>} {
    %c0 = arith.constant 0 : index
    %c0_0 = arith.constant 0 : index
    %0 = vector.load %arg0[%c0, %c0_0] : memref<128x256xf32, #tpu.memory_space<vmem>>, vector<128x256xf32>
    %c0_1 = arith.constant 0 : index
    %c0_2 = arith.constant 0 : index
    %1 = vector.load %arg1[%c0_1, %c0_2] : memref<256x16xf32, #tpu.memory_space<vmem>>, vector<256x16xf32>
    %cst = arith.constant dense<0.000000e+00> : vector<128x16xf32>
    %2 = tpu.matmul %0, %1, %cst {dimension_numbers = #tpu.dot_dimension_numbers<[1], [0], [0], [1], [0, 0, 1, 1], [], []>} : vector<128x256xf32>, vector<256x16xf32>, vector<128x16xf32> -> vector<128x16xf32>
    %c0_3 = arith.constant 0 : index
    %c0_4 = arith.constant 0 : index
    %3 = vector.load %arg2[%c0_3, %c0_4] : memref<1x16xf32, #tpu.memory_space<vmem>>, vector<1x16xf32>
    %4 = vector.broadcast %3 : vector<1x16xf32> to vector<128x16xf32>
    %5 = arith.addf %2, %4 : vector<128x16xf32>
    %cst_5 = arith.constant 0.000000e+00 : f32
    %6 = vector.broadcast %cst_5 : f32 to vector<128x16xf32>
    %7 = arith.maximumf %5, %6 : vector<128x16xf32>
    %c0_6 = arith.constant 0 : index
    %c0_7 = arith.constant 0 : index
    %8 = vector.load %arg3[%c0_6, %c0_7] : memref<256x32xf32, #tpu.memory_space<vmem>>, vector<256x32xf32>
    %cst_8 = arith.constant 0.000000e+00 : f32
    %9 = vector.broadcast %cst_8 : f32 to vector<8x32xf32>
    %10 = vector.extract_strided_slice %7 {offsets = [0, 0], sizes = [8, 16], strides = [1, 1]} : vector<128x16xf32> to vector<8x16xf32>
    %11 = vector.extract_strided_slice %8 {offsets = [0, 0], sizes = [16, 32], strides = [1, 1]} : vector<256x32xf32> to vector<16x32xf32>
    %cst_9 = arith.constant dense<0.000000e+00> : vector<8x32xf32>
    %12 = tpu.matmul %10, %11, %cst_9 {dimension_numbers = #tpu.dot_dimension_numbers<[1], [0], [0], [1], [0, 0, 1, 1], [], []>} : vector<8x16xf32>, vector<16x32xf32>, vector<8x32xf32> -> vector<8x32xf32>
    %13 = arith.addf %9, %12 : vector<8x32xf32>
    %14 = vector.extract_strided_slice %7 {offsets = [8, 0], sizes = [8, 16], strides = [1, 1]} : vector<128x16xf32> to vector<8x16xf32>
    %15 = vector.extract_strided_slice %8 {offsets = [16, 0], sizes = [16, 32], strides = [1, 1]} : vector<256x32xf32> to vector<16x32xf32>
    %cst_10 = arith.constant dense<0.000000e+00> : vector<8x32xf32>
    %16 = tpu.matmul %14, %15, %cst_10 {dimension_numbers = #tpu.dot_dimension_numbers<[1], [0], [0], [1], [0, 0, 1, 1], [], []>} : vector<8x16xf32>, vector<16x32xf32>, vector<8x32xf32> -> vector<8x32xf32>
    %17 = arith.addf %13, %16 : vector<8x32xf32>
    %18 = vector.extract_strided_slice %7 {offsets = [16, 0], sizes = [8, 16], strides = [1, 1]} : vector<128x16xf32> to vector<8x16xf32>
    %19 = vector.extract_strided_slice %8 {offsets = [32, 0], sizes = [16, 32], strides = [1, 1]} : vector<256x32xf32> to vector<16x32xf32>
    %cst_11 = arith.constant dense<0.000000e+00> : vector<8x32xf32>
    %20 = tpu.matmul %18, %19, %cst_11 {dimension_numbers = #tpu.dot_dimension_numbers<[1], [0], [0], [1], [0, 0, 1, 1], [], []>} : vector<8x16xf32>, vector<16x32xf32>, vector<8x32xf32> -> vector<8x32xf32>
    %21 = arith.addf %17, %20 : vector<8x32xf32>
    %22 = vector.extract_strided_slice %7 {offsets = [24, 0], sizes = [8, 16], strides = [1, 1]} : vector<128x16xf32> to vector<8x16xf32>
    %23 = vector.extract_strided_slice %8 {offsets = [48, 0], sizes = [16, 32], strides = [1, 1]} : vector<256x32xf32> to vector<16x32xf32>
    %cst_12 = arith.constant dense<0.000000e+00> : vector<8x32xf32>
    %24 = tpu.matmul %22, %23, %cst_12 {dimension_numbers = #tpu.dot_dimension_numbers<[1], [0], [0], [1], [0, 0, 1, 1], [], []>} : vector<8x16xf32>, vector<16x32xf32>, vector<8x32xf32> -> vector<8x32xf32>
    %25 = arith.addf %21, %24 : vector<8x32xf32>
    %26 = vector.extract_strided_slice %7 {offsets = [32, 0], sizes = [8, 16], strides = [1, 1]} : vector<128x16xf32> to vector<8x16xf32>
    %27 = vector.extract_strided_slice %8 {offsets = [64, 0], sizes = [16, 32], strides = [1, 1]} : vector<256x32xf32> to vector<16x32xf32>
    %cst_13 = arith.constant dense<0.000000e+00> : vector<8x32xf32>
    %28 = tpu.matmul %26, %27, %cst_13 {dimension_numbers = #tpu.dot_dimension_numbers<[1], [0], [0], [1], [0, 0, 1, 1], [], []>} : vector<8x16xf32>, vector<16x32xf32>, vector<8x32xf32> -> vector<8x32xf32>
    %29 = arith.addf %25, %28 : vector<8x32xf32>
    %30 = vector.extract_strided_slice %7 {offsets = [40, 0], sizes = [8, 16], strides = [1, 1]} : vector<128x16xf32> to vector<8x16xf32>
    %31 = vector.extract_strided_slice %8 {offsets = [80, 0], sizes = [16, 32], strides = [1, 1]} : vector<256x32xf32> to vector<16x32xf32>
    %cst_14 = arith.constant dense<0.000000e+00> : vector<8x32xf32>
    %32 = tpu.matmul %30, %31, %cst_14 {dimension_numbers = #tpu.dot_dimension_numbers<[1], [0], [0], [1], [0, 0, 1, 1], [], []>} : vector<8x16xf32>, vector<16x32xf32>, vector<8x32xf32> -> vector<8x32xf32>
    %33 = arith.addf %29, %32 : vector<8x32xf32>
    %34 = vector.extract_strided_slice %7 {offsets = [48, 0], sizes = [8, 16], strides = [1, 1]} : vector<128x16xf32> to vector<8x16xf32>
    %35 = vector.extract_strided_slice %8 {offsets = [96, 0], sizes = [16, 32], strides = [1, 1]} : vector<256x32xf32> to vector<16x32xf32>
    %cst_15 = arith.constant dense<0.000000e+00> : vector<8x32xf32>
    %36 = tpu.matmul %34, %35, %cst_15 {dimension_numbers = #tpu.dot_dimension_numbers<[1], [0], [0], [1], [0, 0, 1, 1], [], []>} : vector<8x16xf32>, vector<16x32xf32>, vector<8x32xf32> -> vector<8x32xf32>
    %37 = arith.addf %33, %36 : vector<8x32xf32>
    %38 = vector.extract_strided_slice %7 {offsets = [56, 0], sizes = [8, 16], strides = [1, 1]} : vector<128x16xf32> to vector<8x16xf32>
    %39 = vector.extract_strided_slice %8 {offsets = [112, 0], sizes = [16, 32], strides = [1, 1]} : vector<256x32xf32> to vector<16x32xf32>
    %cst_16 = arith.constant dense<0.000000e+00> : vector<8x32xf32>
    %40 = tpu.matmul %38, %39, %cst_16 {dimension_numbers = #tpu.dot_dimension_numbers<[1], [0], [0], [1], [0, 0, 1, 1], [], []>} : vector<8x16xf32>, vector<16x32xf32>, vector<8x32xf32> -> vector<8x32xf32>
    %41 = arith.addf %37, %40 : vector<8x32xf32>
    %42 = vector.extract_strided_slice %7 {offsets = [64, 0], sizes = [8, 16], strides = [1, 1]} : vector<128x16xf32> to vector<8x16xf32>
    %43 = vector.extract_strided_slice %8 {offsets = [128, 0], sizes = [16, 32], strides = [1, 1]} : vector<256x32xf32> to vector<16x32xf32>
    %cst_17 = arith.constant dense<0.000000e+00> : vector<8x32xf32>
    %44 = tpu.matmul %42, %43, %cst_17 {dimension_numbers = #tpu.dot_dimension_numbers<[1], [0], [0], [1], [0, 0, 1, 1], [], []>} : vector<8x16xf32>, vector<16x32xf32>, vector<8x32xf32> -> vector<8x32xf32>
    %45 = arith.addf %41, %44 : vector<8x32xf32>
    %46 = vector.extract_strided_slice %7 {offsets = [72, 0], sizes = [8, 16], strides = [1, 1]} : vector<128x16xf32> to vector<8x16xf32>
    %47 = vector.extract_strided_slice %8 {offsets = [144, 0], sizes = [16, 32], strides = [1, 1]} : vector<256x32xf32> to vector<16x32xf32>
    %cst_18 = arith.constant dense<0.000000e+00> : vector<8x32xf32>
    %48 = tpu.matmul %46, %47, %cst_18 {dimension_numbers = #tpu.dot_dimension_numbers<[1], [0], [0], [1], [0, 0, 1, 1], [], []>} : vector<8x16xf32>, vector<16x32xf32>, vector<8x32xf32> -> vector<8x32xf32>
    %49 = arith.addf %45, %48 : vector<8x32xf32>
    %50 = vector.extract_strided_slice %7 {offsets = [80, 0], sizes = [8, 16], strides = [1, 1]} : vector<128x16xf32> to vector<8x16xf32>
    %51 = vector.extract_strided_slice %8 {offsets = [160, 0], sizes = [16, 32], strides = [1, 1]} : vector<256x32xf32> to vector<16x32xf32>
    %cst_19 = arith.constant dense<0.000000e+00> : vector<8x32xf32>
    %52 = tpu.matmul %50, %51, %cst_19 {dimension_numbers = #tpu.dot_dimension_numbers<[1], [0], [0], [1], [0, 0, 1, 1], [], []>} : vector<8x16xf32>, vector<16x32xf32>, vector<8x32xf32> -> vector<8x32xf32>
    %53 = arith.addf %49, %52 : vector<8x32xf32>
    %54 = vector.extract_strided_slice %7 {offsets = [88, 0], sizes = [8, 16], strides = [1, 1]} : vector<128x16xf32> to vector<8x16xf32>
    %55 = vector.extract_strided_slice %8 {offsets = [176, 0], sizes = [16, 32], strides = [1, 1]} : vector<256x32xf32> to vector<16x32xf32>
    %cst_20 = arith.constant dense<0.000000e+00> : vector<8x32xf32>
    %56 = tpu.matmul %54, %55, %cst_20 {dimension_numbers = #tpu.dot_dimension_numbers<[1], [0], [0], [1], [0, 0, 1, 1], [], []>} : vector<8x16xf32>, vector<16x32xf32>, vector<8x32xf32> -> vector<8x32xf32>
    %57 = arith.addf %53, %56 : vector<8x32xf32>
    %58 = vector.extract_strided_slice %7 {offsets = [96, 0], sizes = [8, 16], strides = [1, 1]} : vector<128x16xf32> to vector<8x16xf32>
    %59 = vector.extract_strided_slice %8 {offsets = [192, 0], sizes = [16, 32], strides = [1, 1]} : vector<256x32xf32> to vector<16x32xf32>
    %cst_21 = arith.constant dense<0.000000e+00> : vector<8x32xf32>
    %60 = tpu.matmul %58, %59, %cst_21 {dimension_numbers = #tpu.dot_dimension_numbers<[1], [0], [0], [1], [0, 0, 1, 1], [], []>} : vector<8x16xf32>, vector<16x32xf32>, vector<8x32xf32> -> vector<8x32xf32>
    %61 = arith.addf %57, %60 : vector<8x32xf32>
    %62 = vector.extract_strided_slice %7 {offsets = [104, 0], sizes = [8, 16], strides = [1, 1]} : vector<128x16xf32> to vector<8x16xf32>
    %63 = vector.extract_strided_slice %8 {offsets = [208, 0], sizes = [16, 32], strides = [1, 1]} : vector<256x32xf32> to vector<16x32xf32>
    %cst_22 = arith.constant dense<0.000000e+00> : vector<8x32xf32>
    %64 = tpu.matmul %62, %63, %cst_22 {dimension_numbers = #tpu.dot_dimension_numbers<[1], [0], [0], [1], [0, 0, 1, 1], [], []>} : vector<8x16xf32>, vector<16x32xf32>, vector<8x32xf32> -> vector<8x32xf32>
    %65 = arith.addf %61, %64 : vector<8x32xf32>
    %66 = vector.extract_strided_slice %7 {offsets = [112, 0], sizes = [8, 16], strides = [1, 1]} : vector<128x16xf32> to vector<8x16xf32>
    %67 = vector.extract_strided_slice %8 {offsets = [224, 0], sizes = [16, 32], strides = [1, 1]} : vector<256x32xf32> to vector<16x32xf32>
    %cst_23 = arith.constant dense<0.000000e+00> : vector<8x32xf32>
    %68 = tpu.matmul %66, %67, %cst_23 {dimension_numbers = #tpu.dot_dimension_numbers<[1], [0], [0], [1], [0, 0, 1, 1], [], []>} : vector<8x16xf32>, vector<16x32xf32>, vector<8x32xf32> -> vector<8x32xf32>
    %69 = arith.addf %65, %68 : vector<8x32xf32>
    %70 = vector.extract_strided_slice %7 {offsets = [120, 0], sizes = [8, 16], strides = [1, 1]} : vector<128x16xf32> to vector<8x16xf32>
    %71 = vector.extract_strided_slice %8 {offsets = [240, 0], sizes = [16, 32], strides = [1, 1]} : vector<256x32xf32> to vector<16x32xf32>
    %cst_24 = arith.constant dense<0.000000e+00> : vector<8x32xf32>
    %72 = tpu.matmul %70, %71, %cst_24 {dimension_numbers = #tpu.dot_dimension_numbers<[1], [0], [0], [1], [0, 0, 1, 1], [], []>} : vector<8x16xf32>, vector<16x32xf32>, vector<8x32xf32> -> vector<8x32xf32>
    %73 = arith.addf %69, %72 : vector<8x32xf32>
    %c0_25 = arith.constant 0 : index
    %c0_26 = arith.constant 0 : index
    %74 = vector.load %arg4[%c0_25, %c0_26] : memref<1x32xf32, #tpu.memory_space<vmem>>, vector<1x32xf32>
    %75 = vector.broadcast %74 : vector<1x32xf32> to vector<8x32xf32>
    %76 = arith.addf %73, %75 : vector<8x32xf32>
    %cst_27 = arith.constant 0.000000e+00 : f32
    %77 = vector.broadcast %cst_27 : f32 to vector<8x32xf32>
    %78 = arith.maximumf %76, %77 : vector<8x32xf32>
    %c0_28 = arith.constant 0 : index
    %c0_29 = arith.constant 0 : index
    %79 = vector.load %arg5[%c0_28, %c0_29] : memref<128x256xf32, #tpu.memory_space<vmem>>, vector<128x256xf32>
    %cst_30 = arith.constant 0.000000e+00 : f32
    %80 = vector.broadcast %cst_30 : f32 to vector<2x256xf32>
    %81 = vector.extract_strided_slice %78 {offsets = [0, 0], sizes = [2, 32], strides = [1, 1]} : vector<8x32xf32> to vector<2x32xf32>
    %82 = vector.extract_strided_slice %79 {offsets = [0, 0], sizes = [32, 256], strides = [1, 1]} : vector<128x256xf32> to vector<32x256xf32>
    %cst_31 = arith.constant dense<0.000000e+00> : vector<2x256xf32>
    %83 = tpu.matmul %81, %82, %cst_31 {dimension_numbers = #tpu.dot_dimension_numbers<[1], [0], [0], [1], [0, 0, 1, 1], [], []>} : vector<2x32xf32>, vector<32x256xf32>, vector<2x256xf32> -> vector<2x256xf32>
    %84 = arith.addf %80, %83 : vector<2x256xf32>
    %85 = vector.extract_strided_slice %78 {offsets = [2, 0], sizes = [2, 32], strides = [1, 1]} : vector<8x32xf32> to vector<2x32xf32>
    %86 = vector.extract_strided_slice %79 {offsets = [32, 0], sizes = [32, 256], strides = [1, 1]} : vector<128x256xf32> to vector<32x256xf32>
    %cst_32 = arith.constant dense<0.000000e+00> : vector<2x256xf32>
    %87 = tpu.matmul %85, %86, %cst_32 {dimension_numbers = #tpu.dot_dimension_numbers<[1], [0], [0], [1], [0, 0, 1, 1], [], []>} : vector<2x32xf32>, vector<32x256xf32>, vector<2x256xf32> -> vector<2x256xf32>
    %88 = arith.addf %84, %87 : vector<2x256xf32>
    %89 = vector.extract_strided_slice %78 {offsets = [4, 0], sizes = [2, 32], strides = [1, 1]} : vector<8x32xf32> to vector<2x32xf32>
    %90 = vector.extract_strided_slice %79 {offsets = [64, 0], sizes = [32, 256], strides = [1, 1]} : vector<128x256xf32> to vector<32x256xf32>
    %cst_33 = arith.constant dense<0.000000e+00> : vector<2x256xf32>
    %91 = tpu.matmul %89, %90, %cst_33 {dimension_numbers = #tpu.dot_dimension_numbers<[1], [0], [0], [1], [0, 0, 1, 1], [], []>} : vector<2x32xf32>, vector<32x256xf32>, vector<2x256xf32> -> vector<2x256xf32>
    %92 = arith.addf %88, %91 : vector<2x256xf32>
    %93 = vector.extract_strided_slice %78 {offsets = [6, 0], sizes = [2, 32], strides = [1, 1]} : vector<8x32xf32> to vector<2x32xf32>
    %94 = vector.extract_strided_slice %79 {offsets = [96, 0], sizes = [32, 256], strides = [1, 1]} : vector<128x256xf32> to vector<32x256xf32>
    %cst_34 = arith.constant dense<0.000000e+00> : vector<2x256xf32>
    %95 = tpu.matmul %93, %94, %cst_34 {dimension_numbers = #tpu.dot_dimension_numbers<[1], [0], [0], [1], [0, 0, 1, 1], [], []>} : vector<2x32xf32>, vector<32x256xf32>, vector<2x256xf32> -> vector<2x256xf32>
    %96 = arith.addf %92, %95 : vector<2x256xf32>
    %c0_35 = arith.constant 0 : index
    %c0_36 = arith.constant 0 : index
    %97 = vector.load %arg6[%c0_35, %c0_36] : memref<1x256xf32, #tpu.memory_space<vmem>>, vector<1x256xf32>
    %98 = vector.broadcast %97 : vector<1x256xf32> to vector<2x256xf32>
    %99 = arith.addf %96, %98 : vector<2x256xf32>
    %cst_37 = arith.constant 0.000000e+00 : f32
    %100 = vector.broadcast %cst_37 : f32 to vector<2x256xf32>
    %101 = arith.maximumf %99, %100 : vector<2x256xf32>
    %c0_38 = arith.constant 0 : index
    %c0_39 = arith.constant 0 : index
    %102 = vector.load %arg7[%c0_38, %c0_39] : memref<256x128xf32, #tpu.memory_space<vmem>>, vector<256x128xf32>
    %cst_40 = arith.constant dense<0.000000e+00> : vector<2x128xf32>
    %103 = tpu.matmul %101, %102, %cst_40 {dimension_numbers = #tpu.dot_dimension_numbers<[1], [0], [0], [1], [0, 0, 1, 1], [], []>} : vector<2x256xf32>, vector<256x128xf32>, vector<2x128xf32> -> vector<2x128xf32>
    %c0_41 = arith.constant 0 : index
    %c0_42 = arith.constant 0 : index
    %104 = vector.load %arg8[%c0_41, %c0_42] : memref<1x128xf32, #tpu.memory_space<vmem>>, vector<1x128xf32>
    %105 = vector.broadcast %104 : vector<1x128xf32> to vector<2x128xf32>
    %106 = arith.addf %103, %105 : vector<2x128xf32>
    %c0_43 = arith.constant 0 : index
    %c0_44 = arith.constant 0 : index
    %107 = vector.load %arg9[%c0_43, %c0_44] : memref<2x128xf32, #tpu.memory_space<vmem>>, vector<2x128xf32>
    tpu.vector_store %arg9[%c0_43, %c0_44], %106 {strides = array<i32>} : memref<2x128xf32, #tpu.memory_space<vmem>>, vector<2x128xf32>,
    return
  }
}

</mosaic_0001>

<llo_original>
// kernel: dqn_cnn_forward.1
$region0: #{dqn_cnn_forward.1}
  #allocation0 [shape = 'u32[]', space=smem, size = 0x4, offset = 0x4, fixed_abs, tag = 'smem constant byte address 0x4 - core index']
  #allocation1 [shape = 'u32[144,128]{1,0:T(1,128)}', space=vmem, size = 0x12000, scoped, tag = 'internal scratch']
  %s0 = inlined_call_operand.vmem [shape: f32[128,256], index: 0, kind: input, shape index: {}]
  %s1 = inlined_call_operand.vmem [shape: f32[256,16], index: 1, kind: input, shape index: {}]
  %s2 = inlined_call_operand.vmem [shape: f32[1,16], index: 2, kind: input, shape index: {}]
  %s3 = inlined_call_operand.vmem [shape: f32[256,32], index: 3, kind: input, shape index: {}]
  %s4 = inlined_call_operand.vmem [shape: f32[1,32], index: 4, kind: input, shape index: {}]
  %s5 = inlined_call_operand.vmem [shape: f32[128,256], index: 5, kind: input, shape index: {}]
  %s6 = inlined_call_operand.vmem [shape: f32[1,256], index: 6, kind: input, shape index: {}]
  %s7 = inlined_call_operand.vmem [shape: f32[256,128], index: 7, kind: input, shape index: {}]
  %s8 = inlined_call_operand.vmem [shape: f32[1,128], index: 8, kind: input, shape index: {}]
  %s9 = inlined_call_operand.hbm [shape: f32[2,128], index: 9, kind: output, shape index: {}]
  %s10 = sld [smem:[#allocation0]]
  $region46: #{dqn_cnn_forward.1} parent=0
    _
  %s12 = ssub.s32 1, %s10
  %s13 = scalar_select 0, %s12, %s10
  $region1: #{dqn_cnn_forward.1} parent=0
    #allocation2 [shape = 'u8[1024]{0}', space=vmem, size = 0x400, scoped, tag = 'output window, operand 0, single buffered']
    #allocation3 [shape = 's32[1]{0}', space=sflag, size = 0x4, scoped, tag = 'scoped memory for dqn_cnn_forward.1']
    %14 = vsyncpa [#allocation3], 0
    // Predicated region
    $region2: #{dqn_cnn_forward.1} parent=1 // pred_check
      _
    $region3: #{dqn_cnn_forward.1} parent=1 // pred_check_branch
      %16 = sbr.rel (0) target = $region5
    $region4: #{dqn_cnn_forward.1} parent=1 // pred_region
      _
    $region5: #{dqn_cnn_forward.1} parent=1 // pred_fallthru
      _
    // Predicated region
    $region6: #{dqn_cnn_forward.1} parent=1 // pred_check
      _
    $region7: #{dqn_cnn_forward.1} parent=1 // pred_check_branch
      %18 = sbr.rel (0) target = $region9
    $region8: #{dqn_cnn_forward.1} parent=1 // pred_region
      _
    $region9: #{dqn_cnn_forward.1} parent=1 // pred_fallthru
      _
    // Predicated region
    $region10: #{dqn_cnn_forward.1} parent=1 // pred_check
      _
    $region11: #{dqn_cnn_forward.1} parent=1 // pred_check_branch
      %20 = sbr.rel (0) target = $region13
    $region12: #{dqn_cnn_forward.1} parent=1 // pred_region
      _
    $region13: #{dqn_cnn_forward.1} parent=1 // pred_fallthru
      _
    // Predicated region
    $region14: #{dqn_cnn_forward.1} parent=1 // pred_check
      _
    $region15: #{dqn_cnn_forward.1} parent=1 // pred_check_branch
      %22 = sbr.rel (0) target = $region17
    $region16: #{dqn_cnn_forward.1} parent=1 // pred_region
      _
    $region17: #{dqn_cnn_forward.1} parent=1 // pred_fallthru
      _
    // Predicated region
    $region18: #{dqn_cnn_forward.1} parent=1 // pred_check
      _
    $region19: #{dqn_cnn_forward.1} parent=1 // pred_check_branch
      %24 = sbr.rel (0) target = $region21
    $region20: #{dqn_cnn_forward.1} parent=1 // pred_region
      _
    $region21: #{dqn_cnn_forward.1} parent=1 // pred_fallthru
      _
    // Predicated region
    $region22: #{dqn_cnn_forward.1} parent=1 // pred_check
      _
    $region23: #{dqn_cnn_forward.1} parent=1 // pred_check_branch
      %26 = sbr.rel (0) target = $region25
    $region24: #{dqn_cnn_forward.1} parent=1 // pred_region
      _
    $region25: #{dqn_cnn_forward.1} parent=1 // pred_fallthru
      _
    // Predicated region
    $region26: #{dqn_cnn_forward.1} parent=1 // pred_check
      _
    $region27: #{dqn_cnn_forward.1} parent=1 // pred_check_branch
      %28 = sbr.rel (0) target = $region29
    $region28: #{dqn_cnn_forward.1} parent=1 // pred_region
      _
    $region29: #{dqn_cnn_forward.1} parent=1 // pred_fallthru
      _
    // Predicated region
    $region30: #{dqn_cnn_forward.1} parent=1 // pred_check
      _
    $region31: #{dqn_cnn_forward.1} parent=1 // pred_check_branch
      %30 = sbr.rel (0) target = $region33
    $region32: #{dqn_cnn_forward.1} parent=1 // pred_region
      _
    $region33: #{dqn_cnn_forward.1} parent=1 // pred_fallthru
      _
    // Predicated region
    $region34: #{dqn_cnn_forward.1} parent=1 // pred_check
      _
    $region35: #{dqn_cnn_forward.1} parent=1 // pred_check_branch
      %32 = sbr.rel (0) target = $region37
    $region36: #{dqn_cnn_forward.1} parent=1 // pred_region
      _
    $region37: #{dqn_cnn_forward.1} parent=1 // pred_fallthru
      _
    %v33 = vld [vmem:[%s0] sm:$0xff]
    %v34 = vld [vmem:[%s0 + $0x8] sm:$0xff]
    %v35 = vld [vmem:[%s0 + $0x10] sm:$0xff]
    %v36 = vld [vmem:[%s0 + $0x18] sm:$0xff]
    %v37 = vld [vmem:[%s0 + $0x20] sm:$0xff]
    %v38 = vld [vmem:[%s0 + $0x28] sm:$0xff]
    %v39 = vld [vmem:[%s0 + $0x30] sm:$0xff]
    %v40 = vld [vmem:[%s0 + $0x38] sm:$0xff]
    %v41 = vld [vmem:[%s0 + $0x40] sm:$0xff]
    %v42 = vld [vmem:[%s0 + $0x48] sm:$0xff]
    %v43 = vld [vmem:[%s0 + $0x50] sm:$0xff]
    %v44 = vld [vmem:[%s0 + $0x58] sm:$0xff]
    %v45 = vld [vmem:[%s0 + $0x60] sm:$0xff]
    %v46 = vld [vmem:[%s0 + $0x68] sm:$0xff]
    %v47 = vld [vmem:[%s0 + $0x70] sm:$0xff]
    %v48 = vld [vmem:[%s0 + $0x78] sm:$0xff]
    %v49 = vld [vmem:[%s0 + $0x80] sm:$0xff]
    %v50 = vld [vmem:[%s0 + $0x88] sm:$0xff]
    %v51 = vld [vmem:[%s0 + $0x90] sm:$0xff]
    %v52 = vld [vmem:[%s0 + $0x98] sm:$0xff]
    %v53 = vld [vmem:[%s0 + $0xa0] sm:$0xff]
    %v54 = vld [vmem:[%s0 + $0xa8] sm:$0xff]
    %v55 = vld [vmem:[%s0 + $0xb0] sm:$0xff]
    %v56 = vld [vmem:[%s0 + $0xb8] sm:$0xff]
    %v57 = vld [vmem:[%s0 + $0xc0] sm:$0xff]
    %v58 = vld [vmem:[%s0 + $0xc8] sm:$0xff]
    %v59 = vld [vmem:[%s0 + $0xd0] sm:$0xff]
    %v60 = vld [vmem:[%s0 + $0xd8] sm:$0xff]
    %v61 = vld [vmem:[%s0 + $0xe0] sm:$0xff]
    %v62 = vld [vmem:[%s0 + $0xe8] sm:$0xff]
    %v63 = vld [vmem:[%s0 + $0xf0] sm:$0xff]
    %v64 = vld [vmem:[%s0 + $0xf8] sm:$0xff]
    %v65 = vld [vmem:[%s1] sm:$0xff]
    %v66 = vld [vmem:[%s1 + $0x8] sm:$0xff]
    %v67 = vld [vmem:[%s1 + $0x10] sm:$0xff]
    %v68 = vld [vmem:[%s1 + $0x18] sm:$0xff]
    %v69 = vld [vmem:[%s1 + $0x20] sm:$0xff]
    %v70 = vld [vmem:[%s1 + $0x28] sm:$0xff]
    %v71 = vld [vmem:[%s1 + $0x30] sm:$0xff]
    %v72 = vld [vmem:[%s1 + $0x38] sm:$0xff]
    %v73 = vld [vmem:[%s1 + $0x40] sm:$0xff]
    %v74 = vld [vmem:[%s1 + $0x48] sm:$0xff]
    %v75 = vld [vmem:[%s1 + $0x50] sm:$0xff]
    %v76 = vld [vmem:[%s1 + $0x58] sm:$0xff]
    %v77 = vld [vmem:[%s1 + $0x60] sm:$0xff]
    %v78 = vld [vmem:[%s1 + $0x68] sm:$0xff]
    %v79 = vld [vmem:[%s1 + $0x70] sm:$0xff]
    %v80 = vld [vmem:[%s1 + $0x78] sm:$0xff]
    %v81 = vld [vmem:[%s1 + $0x80] sm:$0xff]
    %v82 = vld [vmem:[%s1 + $0x88] sm:$0xff]
    %v83 = vld [vmem:[%s1 + $0x90] sm:$0xff]
    %v84 = vld [vmem:[%s1 + $0x98] sm:$0xff]
    %v85 = vld [vmem:[%s1 + $0xa0] sm:$0xff]
    %v86 = vld [vmem:[%s1 + $0xa8] sm:$0xff]
    %v87 = vld [vmem:[%s1 + $0xb0] sm:$0xff]
    %v88 = vld [vmem:[%s1 + $0xb8] sm:$0xff]
    %v89 = vld [vmem:[%s1 + $0xc0] sm:$0xff]
    %v90 = vld [vmem:[%s1 + $0xc8] sm:$0xff]
    %v91 = vld [vmem:[%s1 + $0xd0] sm:$0xff]
    %v92 = vld [vmem:[%s1 + $0xd8] sm:$0xff]
    %v93 = vld [vmem:[%s1 + $0xe0] sm:$0xff]
    %v94 = vld [vmem:[%s1 + $0xe8] sm:$0xff]
    %v95 = vld [vmem:[%s1 + $0xf0] sm:$0xff]
    %v96 = vld [vmem:[%s1 + $0xf8] sm:$0xff]
    %v97 = vld [vmem:[%s2] sm:$0x1]
    %v99 = vlaneseq
    %v100 = vshrl.u32 %v99, 7
    %v101 = vsub.s32 0, %v100
    %v102 = vrot.slane %v97, %v101
    %104 = vmatprep.subr.mxu0 0.0
    %105 = vmatpush1.msra.mxu0 %v80
    %106 = vmatprep.subr.mxu0 0.0
    %107 = vmatpush1.msra.mxu0 %v79
    %108 = vmatprep.subr.mxu0 0.0
    %109 = vmatpush1.msra.mxu0 %v78
    %110 = vmatprep.subr.mxu0 0.0
    %111 = vmatpush1.msra.mxu0 %v77
    %112 = vmatprep.subr.mxu0 0.0
    %113 = vmatpush1.msra.mxu0 %v76
    %114 = vmatprep.subr.mxu0 0.0
    %115 = vmatpush1.msra.mxu0 %v75
    %116 = vmatprep.subr.mxu0 0.0
    %117 = vmatpush1.msra.mxu0 %v74
    %118 = vmatprep.subr.mxu0 0.0
    %119 = vmatpush1.msra.mxu0 %v73
    %120 = vmatprep.subr.mxu0 0.0
    %121 = vmatpush1.msra.mxu0 %v72
    %122 = vmatprep.subr.mxu0 0.0
    %123 = vmatpush1.msra.mxu0 %v71
    %124 = vmatprep.subr.mxu0 0.0
    %125 = vmatpush1.msra.mxu0 %v70
    %126 = vmatprep.subr.mxu0 0.0
    %127 = vmatpush1.msra.mxu0 %v69
    %128 = vmatprep.subr.mxu0 0.0
    %129 = vmatpush1.msra.mxu0 %v68
    %130 = vmatprep.subr.mxu0 0.0
    %131 = vmatpush1.msra.mxu0 %v67
    %132 = vmatprep.subr.mxu0 0.0
    %133 = vmatpush1.msra.mxu0 %v66
    %134 = vmatprep.subr.mxu0 0.0
    %135 = vmatpush1.msra.mxu0 %v65
    %136 = vmatprep.subr.mxu0 0.0
    %137 = vmatpush2.msra.mxu0 %v96
    %138 = vmatprep.subr.mxu0 0.0
    %139 = vmatpush2.msra.mxu0 %v95
    %140 = vmatprep.subr.mxu0 0.0
    %141 = vmatpush2.msra.mxu0 %v94
    %142 = vmatprep.subr.mxu0 0.0
    %143 = vmatpush2.msra.mxu0 %v93
    %144 = vmatprep.subr.mxu0 0.0
    %145 = vmatpush2.msra.mxu0 %v92
    %146 = vmatprep.subr.mxu0 0.0
    %147 = vmatpush2.msra.mxu0 %v91
    %148 = vmatprep.subr.mxu0 0.0
    %149 = vmatpush2.msra.mxu0 %v90
    %150 = vmatprep.subr.mxu0 0.0
    %151 = vmatpush2.msra.mxu0 %v89
    %152 = vmatprep.subr.mxu0 0.0
    %153 = vmatpush2.msra.mxu0 %v88
    %154 = vmatprep.subr.mxu0 0.0
    %155 = vmatpush2.msra.mxu0 %v87
    %156 = vmatprep.subr.mxu0 0.0
    %157 = vmatpush2.msra.mxu0 %v86
    %158 = vmatprep.subr.mxu0 0.0
    %159 = vmatpush2.msra.mxu0 %v85
    %160 = vmatprep.subr.mxu0 0.0
    %161 = vmatpush2.msra.mxu0 %v84
    %162 = vmatprep.subr.mxu0 0.0
    %163 = vmatpush2.msra.mxu0 %v83
    %164 = vmatprep.subr.mxu0 0.0
    %165 = vmatpush2.msra.mxu0 %v82
    %166 = vmatprep.subr.mxu0 0.0
    %167 = vmatpush2.msra.mxu0 %v81
    %168 = vmatprep.mubr.f32.mxu0 %v34
    %169 = vmatmul.mubr.f32.gmra.mxu0 %v33
    %v170 = vpop.f32.mrf.mxu0
    %v171 = vadd.f32 %v102, %v170
    %v172 = vpop.f32.mrf.mxu0
    %173 = vmatprep.mubr.f32.mxu0 %v36
    %174 = vmatmul.mubr.f32.gmra.mxu0 %v35
    %v175 = vpop.f32.mrf.mxu0
    %v176 = vadd.f32 %v102, %v175
    %v177 = vpop.f32.mrf.mxu0
    %178 = vmatprep.mubr.f32.mxu0 %v38
    %179 = vmatmul.mubr.f32.gmra.mxu0 %v37
    %v180 = vpop.f32.mrf.mxu0
    %v181 = vadd.f32 %v102, %v180
    %v182 = vpop.f32.mrf.mxu0
    %183 = vmatprep.mubr.f32.mxu0 %v40
    %184 = vmatmul.mubr.f32.gmra.mxu0 %v39
    %v185 = vpop.f32.mrf.mxu0
    %v186 = vadd.f32 %v102, %v185
    %v187 = vpop.f32.mrf.mxu0
    %188 = vmatprep.mubr.f32.mxu0 %v42
    %189 = vmatmul.mubr.f32.gmra.mxu0 %v41
    %v190 = vpop.f32.mrf.mxu0
    %v191 = vadd.f32 %v102, %v190
    %v192 = vpop.f32.mrf.mxu0
    %193 = vmatprep.mubr.f32.mxu0 %v44
    %194 = vmatmul.mubr.f32.gmra.mxu0 %v43
    %v195 = vpop.f32.mrf.mxu0
    %v196 = vadd.f32 %v102, %v195
    %v197 = vpop.f32.mrf.mxu0
    %198 = vmatprep.mubr.f32.mxu0 %v46
    %199 = vmatmul.mubr.f32.gmra.mxu0 %v45
    %v200 = vpop.f32.mrf.mxu0
    %v201 = vadd.f32 %v102, %v200
    %v202 = vpop.f32.mrf.mxu0
    %203 = vmatprep.mubr.f32.mxu0 %v48
    %204 = vmatmul.mubr.f32.gmra.mxu0 %v47
    %v205 = vpop.f32.mrf.mxu0
    %v206 = vadd.f32 %v102, %v205
    %v207 = vpop.f32.mrf.mxu0
    %208 = vmatprep.mubr.f32.mxu0 %v50
    %209 = vmatmul.mubr.f32.gmra.mxu0 %v49
    %v210 = vpop.f32.mrf.mxu0
    %v211 = vadd.f32 %v102, %v210
    %v212 = vpop.f32.mrf.mxu0
    %213 = vmatprep.mubr.f32.mxu0 %v52
    %214 = vmatmul.mubr.f32.gmra.mxu0 %v51
    %v215 = vpop.f32.mrf.mxu0
    %v216 = vadd.f32 %v102, %v215
    %v217 = vpop.f32.mrf.mxu0
    %218 = vmatprep.mubr.f32.mxu0 %v54
    %219 = vmatmul.mubr.f32.gmra.mxu0 %v53
    %v220 = vpop.f32.mrf.mxu0
    %v221 = vadd.f32 %v102, %v220
    %v222 = vpop.f32.mrf.mxu0
    %223 = vmatprep.mubr.f32.mxu0 %v56
    %224 = vmatmul.mubr.f32.gmra.mxu0 %v55
    %v225 = vpop.f32.mrf.mxu0
    %v226 = vadd.f32 %v102, %v225
    %v227 = vpop.f32.mrf.mxu0
    %228 = vmatprep.mubr.f32.mxu0 %v58
    %229 = vmatmul.mubr.f32.gmra.mxu0 %v57
    %v230 = vpop.f32.mrf.mxu0
    %v231 = vadd.f32 %v102, %v230
    %v232 = vpop.f32.mrf.mxu0
    %233 = vmatprep.mubr.f32.mxu0 %v60
    %234 = vmatmul.mubr.f32.gmra.mxu0 %v59
    %v235 = vpop.f32.mrf.mxu0
    %v236 = vadd.f32 %v102, %v235
    %v237 = vpop.f32.mrf.mxu0
    %238 = vmatprep.mubr.f32.mxu0 %v62
    %239 = vmatmul.mubr.f32.gmra.mxu0 %v61
    %v240 = vpop.f32.mrf.mxu0
    %v241 = vadd.f32 %v102, %v240
    %v242 = vpop.f32.mrf.mxu0
    %243 = vmatprep.mubr.f32.mxu0 %v64
    %244 = vmatmul.mubr.f32.gmra.mxu0 %v63
    %v245 = vpop.f32.mrf.mxu0
    %v246 = vadd.f32 %v102, %v245
    %v247 = vpop.f32.mrf.mxu0
    %248 = vdwg.mxu0
    %v249 = vmax.f32 %v171, 0.0
    %v250 = vmax.f32 %v176, 0.0
    %v251 = vmax.f32 %v181, 0.0
    %v252 = vmax.f32 %v186, 0.0
    %v253 = vmax.f32 %v191, 0.0
    %v254 = vmax.f32 %v196, 0.0
    %v255 = vmax.f32 %v201, 0.0
    %v256 = vmax.f32 %v206, 0.0
    %v257 = vmax.f32 %v211, 0.0
    %v258 = vmax.f32 %v216, 0.0
    %v259 = vmax.f32 %v221, 0.0
    %v260 = vmax.f32 %v226, 0.0
    %v261 = vmax.f32 %v231, 0.0
    %v262 = vmax.f32 %v236, 0.0
    %v263 = vmax.f32 %v241, 0.0
    %v264 = vmax.f32 %v246, 0.0
    %v265 = vld [vmem:[%s3] sm:$0xff]
    %v266 = vld [vmem:[%s3 + $0x8] sm:$0xff]
    %v267 = vld [vmem:[%s3 + $0x10] sm:$0xff]
    %v268 = vld [vmem:[%s3 + $0x18] sm:$0xff]
    %v269 = vld [vmem:[%s3 + $0x20] sm:$0xff]
    %v270 = vld [vmem:[%s3 + $0x28] sm:$0xff]
    %v271 = vld [vmem:[%s3 + $0x30] sm:$0xff]
    %v272 = vld [vmem:[%s3 + $0x38] sm:$0xff]
    %v273 = vld [vmem:[%s3 + $0x40] sm:$0xff]
    %v274 = vld [vmem:[%s3 + $0x48] sm:$0xff]
    %v275 = vld [vmem:[%s3 + $0x50] sm:$0xff]
    %v276 = vld [vmem:[%s3 + $0x58] sm:$0xff]
    %v277 = vld [vmem:[%s3 + $0x60] sm:$0xff]
    %v278 = vld [vmem:[%s3 + $0x68] sm:$0xff]
    %v279 = vld [vmem:[%s3 + $0x70] sm:$0xff]
    %v280 = vld [vmem:[%s3 + $0x78] sm:$0xff]
    %v281 = vld [vmem:[%s3 + $0x80] sm:$0xff]
    %v282 = vld [vmem:[%s3 + $0x88] sm:$0xff]
    %v283 = vld [vmem:[%s3 + $0x90] sm:$0xff]
    %v284 = vld [vmem:[%s3 + $0x98] sm:$0xff]
    %v285 = vld [vmem:[%s3 + $0xa0] sm:$0xff]
    %v286 = vld [vmem:[%s3 + $0xa8] sm:$0xff]
    %v287 = vld [vmem:[%s3 + $0xb0] sm:$0xff]
    %v288 = vld [vmem:[%s3 + $0xb8] sm:$0xff]
    %v289 = vld [vmem:[%s3 + $0xc0] sm:$0xff]
    %v290 = vld [vmem:[%s3 + $0xc8] sm:$0xff]
    %v291 = vld [vmem:[%s3 + $0xd0] sm:$0xff]
    %v292 = vld [vmem:[%s3 + $0xd8] sm:$0xff]
    %v293 = vld [vmem:[%s3 + $0xe0] sm:$0xff]
    %v294 = vld [vmem:[%s3 + $0xe8] sm:$0xff]
    %v295 = vld [vmem:[%s3 + $0xf0] sm:$0xff]
    %v296 = vld [vmem:[%s3 + $0xf8] sm:$0xff]
    %vm297 = vcmask 130048
    %v299 = vsel %vm297, %v250, 0
    %301 = vmatprep.subr.mxu0 0.0
    %302 = vmatpush1.msra.mxu0 0.0
    %303 = vmatprep.subr.mxu0 0.0
    %304 = vmatpush1.msra.mxu0 0.0
    %305 = vmatprep.subr.mxu0 0.0
    %306 = vmatpush1.msra.mxu0 0.0
    %307 = vmatprep.subr.mxu0 0.0
    %308 = vmatpush1.msra.mxu0 0.0
    %309 = vmatprep.subr.mxu0 0.0
    %310 = vmatpush1.msra.mxu0 0.0
    %311 = vmatprep.subr.mxu0 0.0
    %312 = vmatpush1.msra.mxu0 0.0
    %313 = vmatprep.subr.mxu0 0.0
    %314 = vmatpush1.msra.mxu0 0.0
    %315 = vmatprep.subr.mxu0 0.0
    %316 = vmatpush1.msra.mxu0 0.0
    %317 = vmatprep.subr.mxu0 0.0
    %318 = vmatpush1.msra.mxu0 0.0
    %319 = vmatprep.subr.mxu0 0.0
    %320 = vmatpush1.msra.mxu0 0.0
    %321 = vmatprep.subr.mxu0 0.0
    %322 = vmatpush1.msra.mxu0 0.0
    %323 = vmatprep.subr.mxu0 0.0
    %324 = vmatpush1.msra.mxu0 0.0
    %325 = vmatprep.subr.mxu0 0.0
    %326 = vmatpush1.msra.mxu0 0.0
    %327 = vmatprep.subr.mxu0 0.0
    %328 = vmatpush1.msra.mxu0 0.0
    %329 = vmatprep.subr.mxu0 0.0
    %330 = vmatpush1.msra.mxu0 %v268
    %331 = vmatprep.subr.mxu0 0.0
    %332 = vmatpush1.msra.mxu0 %v267
    %333 = vmatprep.subr.mxu0 0.0
    %334 = vmatpush2.msra.mxu0 0.0
    %335 = vmatprep.subr.mxu0 0.0
    %336 = vmatpush2.msra.mxu0 0.0
    %337 = vmatprep.subr.mxu0 0.0
    %338 = vmatpush2.msra.mxu0 0.0
    %339 = vmatprep.subr.mxu0 0.0
    %340 = vmatpush2.msra.mxu0 0.0
    %341 = vmatprep.subr.mxu0 0.0
    %342 = vmatpush2.msra.mxu0 0.0
    %343 = vmatprep.subr.mxu0 0.0
    %344 = vmatpush2.msra.mxu0 0.0
    %345 = vmatprep.subr.mxu0 0.0
    %346 = vmatpush2.msra.mxu0 0.0
    %347 = vmatprep.subr.mxu0 0.0
    %348 = vmatpush2.msra.mxu0 0.0
    %349 = vmatprep.subr.mxu0 0.0
    %350 = vmatpush2.msra.mxu0 0.0
    %351 = vmatprep.subr.mxu0 0.0
    %352 = vmatpush2.msra.mxu0 0.0
    %353 = vmatprep.subr.mxu0 0.0
    %354 = vmatpush2.msra.mxu0 0.0
    %355 = vmatprep.subr.mxu0 0.0
    %356 = vmatpush2.msra.mxu0 0.0
    %357 = vmatprep.subr.mxu0 0.0
    %358 = vmatpush2.msra.mxu0 0.0
    %359 = vmatprep.subr.mxu0 0.0
    %360 = vmatpush2.msra.mxu0 0.0
    %361 = vmatprep.subr.mxu0 0.0
    %362 = vmatpush2.msra.mxu0 0.0
    %363 = vmatprep.subr.mxu0 0.0
    %364 = vmatpush2.msra.mxu0 0.0
    %365 = vmatprep.mubr.f32.mxu0 0.0
    %366 = vmatmul.mubr.f32.gmra.mxu0 %v299
    %v367 = vpop.f32.mrf.mxu0
    %v368 = vadd.f32 0.0, %v367
    %v369 = vpop.f32.mrf.mxu0
    %370 = vdwg.mxu0
    %v372 = vsel %vm297, %v249, 0
    %374 = vmatprep.subr.mxu0 0.0
    %375 = vmatpush1.msra.mxu0 0.0
    %376 = vmatprep.subr.mxu0 0.0
    %377 = vmatpush1.msra.mxu0 0.0
    %378 = vmatprep.subr.mxu0 0.0
    %379 = vmatpush1.msra.mxu0 0.0
    %380 = vmatprep.subr.mxu0 0.0
    %381 = vmatpush1.msra.mxu0 0.0
    %382 = vmatprep.subr.mxu0 0.0
    %383 = vmatpush1.msra.mxu0 0.0
    %384 = vmatprep.subr.mxu0 0.0
    %385 = vmatpush1.msra.mxu0 0.0
    %386 = vmatprep.subr.mxu0 0.0
    %387 = vmatpush1.msra.mxu0 0.0
    %388 = vmatprep.subr.mxu0 0.0
    %389 = vmatpush1.msra.mxu0 0.0
    %390 = vmatprep.subr.mxu0 0.0
    %391 = vmatpush1.msra.mxu0 0.0
    %392 = vmatprep.subr.mxu0 0.0
    %393 = vmatpush1.msra.mxu0 0.0
    %394 = vmatprep.subr.mxu0 0.0
    %395 = vmatpush1.msra.mxu0 0.0
    %396 = vmatprep.subr.mxu0 0.0
    %397 = vmatpush1.msra.mxu0 0.0
    %398 = vmatprep.subr.mxu0 0.0
    %399 = vmatpush1.msra.mxu0 0.0
    %400 = vmatprep.subr.mxu0 0.0
    %401 = vmatpush1.msra.mxu0 0.0
    %402 = vmatprep.subr.mxu0 0.0
    %403 = vmatpush1.msra.mxu0 %v266
    %404 = vmatprep.subr.mxu0 0.0
    %405 = vmatpush1.msra.mxu0 %v265
    %406 = vmatprep.subr.mxu0 0.0
    %407 = vmatpush2.msra.mxu0 0.0
    %408 = vmatprep.subr.mxu0 0.0
    %409 = vmatpush2.msra.mxu0 0.0
    %410 = vmatprep.subr.mxu0 0.0
    %411 = vmatpush2.msra.mxu0 0.0
    %412 = vmatprep.subr.mxu0 0.0
    %413 = vmatpush2.msra.mxu0 0.0
    %414 = vmatprep.subr.mxu0 0.0
    %415 = vmatpush2.msra.mxu0 0.0
    %416 = vmatprep.subr.mxu0 0.0
    %417 = vmatpush2.msra.mxu0 0.0
    %418 = vmatprep.subr.mxu0 0.0
    %419 = vmatpush2.msra.mxu0 0.0
    %420 = vmatprep.subr.mxu0 0.0
    %421 = vmatpush2.msra.mxu0 0.0
    %422 = vmatprep.subr.mxu0 0.0
    %423 = vmatpush2.msra.mxu0 0.0
    %424 = vmatprep.subr.mxu0 0.0
    %425 = vmatpush2.msra.mxu0 0.0
    %426 = vmatprep.subr.mxu0 0.0
    %427 = vmatpush2.msra.mxu0 0.0
    %428 = vmatprep.subr.mxu0 0.0
    %429 = vmatpush2.msra.mxu0 0.0
    %430 = vmatprep.subr.mxu0 0.0
    %431 = vmatpush2.msra.mxu0 0.0
    %432 = vmatprep.subr.mxu0 0.0
    %433 = vmatpush2.msra.mxu0 0.0
    %434 = vmatprep.subr.mxu0 0.0
    %435 = vmatpush2.msra.mxu0 0.0
    %436 = vmatprep.subr.mxu0 0.0
    %437 = vmatpush2.msra.mxu0 0.0
    %438 = vmatprep.mubr.f32.mxu0 0.0
    %439 = vmatmul.mubr.f32.gmra.mxu0 %v372
    %v440 = vpop.f32.mrf.mxu0
    %v441 = vadd.f32 %v368, %v440
    %v442 = vpop.f32.mrf.mxu0
    %443 = vdwg.mxu0
    %v445 = vsel %vm297, %v251, 0
    %447 = vmatprep.subr.mxu0 0.0
    %448 = vmatpush1.msra.mxu0 0.0
    %449 = vmatprep.subr.mxu0 0.0
    %450 = vmatpush1.msra.mxu0 0.0
    %451 = vmatprep.subr.mxu0 0.0
    %452 = vmatpush1.msra.mxu0 0.0
    %453 = vmatprep.subr.mxu0 0.0
    %454 = vmatpush1.msra.mxu0 0.0
    %455 = vmatprep.subr.mxu0 0.0
    %456 = vmatpush1.msra.mxu0 0.0
    %457 = vmatprep.subr.mxu0 0.0
    %458 = vmatpush1.msra.mxu0 0.0
    %459 = vmatprep.subr.mxu0 0.0
    %460 = vmatpush1.msra.mxu0 0.0
    %461 = vmatprep.subr.mxu0 0.0
    %462 = vmatpush1.msra.mxu0 0.0
    %463 = vmatprep.subr.mxu0 0.0
    %464 = vmatpush1.msra.mxu0 0.0
    %465 = vmatprep.subr.mxu0 0.0
    %466 = vmatpush1.msra.mxu0 0.0
    %467 = vmatprep.subr.mxu0 0.0
    %468 = vmatpush1.msra.mxu0 0.0
    %469 = vmatprep.subr.mxu0 0.0
    %470 = vmatpush1.msra.mxu0 0.0
    %471 = vmatprep.subr.mxu0 0.0
    %472 = vmatpush1.msra.mxu0 0.0
    %473 = vmatprep.subr.mxu0 0.0
    %474 = vmatpush1.msra.mxu0 0.0
    %475 = vmatprep.subr.mxu0 0.0
    %476 = vmatpush1.msra.mxu0 %v270
    %477 = vmatprep.subr.mxu0 0.0
    %478 = vmatpush1.msra.mxu0 %v269
    %479 = vmatprep.subr.mxu0 0.0
    %480 = vmatpush2.msra.mxu0 0.0
    %481 = vmatprep.subr.mxu0 0.0
    %482 = vmatpush2.msra.mxu0 0.0
    %483 = vmatprep.subr.mxu0 0.0
    %484 = vmatpush2.msra.mxu0 0.0
    %485 = vmatprep.subr.mxu0 0.0
    %486 = vmatpush2.msra.mxu0 0.0
    %487 = vmatprep.subr.mxu0 0.0
    %488 = vmatpush2.msra.mxu0 0.0
    %489 = vmatprep.subr.mxu0 0.0
    %490 = vmatpush2.msra.mxu0 0.0
    %491 = vmatprep.subr.mxu0 0.0
    %492 = vmatpush2.msra.mxu0 0.0
    %493 = vmatprep.subr.mxu0 0.0
    %494 = vmatpush2.msra.mxu0 0.0
    %495 = vmatprep.subr.mxu0 0.0
    %496 = vmatpush2.msra.mxu0 0.0
    %497 = vmatprep.subr.mxu0 0.0
    %498 = vmatpush2.msra.mxu0 0.0
    %499 = vmatprep.subr.mxu0 0.0
    %500 = vmatpush2.msra.mxu0 0.0
    %501 = vmatprep.subr.mxu0 0.0
    %502 = vmatpush2.msra.mxu0 0.0
    %503 = vmatprep.subr.mxu0 0.0
    %504 = vmatpush2.msra.mxu0 0.0
    %505 = vmatprep.subr.mxu0 0.0
    %506 = vmatpush2.msra.mxu0 0.0
    %507 = vmatprep.subr.mxu0 0.0
    %508 = vmatpush2.msra.mxu0 0.0
    %509 = vmatprep.subr.mxu0 0.0
    %510 = vmatpush2.msra.mxu0 0.0
    %511 = vmatprep.mubr.f32.mxu0 0.0
    %512 = vmatmul.mubr.f32.gmra.mxu0 %v445
    %v513 = vpop.f32.mrf.mxu0
    %v514 = vadd.f32 0.0, %v513
    %v515 = vpop.f32.mrf.mxu0
    %516 = vdwg.mxu0
    %v517 = vadd.f32 %v441, %v514
    %v519 = vsel %vm297, %v252, 0
    %521 = vmatprep.subr.mxu0 0.0
    %522 = vmatpush1.msra.mxu0 0.0
    %523 = vmatprep.subr.mxu0 0.0
    %524 = vmatpush1.msra.mxu0 0.0
    %525 = vmatprep.subr.mxu0 0.0
    %526 = vmatpush1.msra.mxu0 0.0
    %527 = vmatprep.subr.mxu0 0.0
    %528 = vmatpush1.msra.mxu0 0.0
    %529 = vmatprep.subr.mxu0 0.0
    %530 = vmatpush1.msra.mxu0 0.0
    %531 = vmatprep.subr.mxu0 0.0
    %532 = vmatpush1.msra.mxu0 0.0
    %533 = vmatprep.subr.mxu0 0.0
    %534 = vmatpush1.msra.mxu0 0.0
    %535 = vmatprep.subr.mxu0 0.0
    %536 = vmatpush1.msra.mxu0 0.0
    %537 = vmatprep.subr.mxu0 0.0
    %538 = vmatpush1.msra.mxu0 0.0
    %539 = vmatprep.subr.mxu0 0.0
    %540 = vmatpush1.msra.mxu0 0.0
    %541 = vmatprep.subr.mxu0 0.0
    %542 = vmatpush1.msra.mxu0 0.0
    %543 = vmatprep.subr.mxu0 0.0
    %544 = vmatpush1.msra.mxu0 0.0
    %545 = vmatprep.subr.mxu0 0.0
    %546 = vmatpush1.msra.mxu0 0.0
    %547 = vmatprep.subr.mxu0 0.0
    %548 = vmatpush1.msra.mxu0 0.0
    %549 = vmatprep.subr.mxu0 0.0
    %550 = vmatpush1.msra.mxu0 %v272
    %551 = vmatprep.subr.mxu0 0.0
    %552 = vmatpush1.msra.mxu0 %v271
    %553 = vmatprep.subr.mxu0 0.0
    %554 = vmatpush2.msra.mxu0 0.0
    %555 = vmatprep.subr.mxu0 0.0
    %556 = vmatpush2.msra.mxu0 0.0
    %557 = vmatprep.subr.mxu0 0.0
    %558 = vmatpush2.msra.mxu0 0.0
    %559 = vmatprep.subr.mxu0 0.0
    %560 = vmatpush2.msra.mxu0 0.0
    %561 = vmatprep.subr.mxu0 0.0
    %562 = vmatpush2.msra.mxu0 0.0
    %563 = vmatprep.subr.mxu0 0.0
    %564 = vmatpush2.msra.mxu0 0.0
    %565 = vmatprep.subr.mxu0 0.0
    %566 = vmatpush2.msra.mxu0 0.0
    %567 = vmatprep.subr.mxu0 0.0
    %568 = vmatpush2.msra.mxu0 0.0
    %569 = vmatprep.subr.mxu0 0.0
    %570 = vmatpush2.msra.mxu0 0.0
    %571 = vmatprep.subr.mxu0 0.0
    %572 = vmatpush2.msra.mxu0 0.0
    %573 = vmatprep.subr.mxu0 0.0
    %574 = vmatpush2.msra.mxu0 0.0
    %575 = vmatprep.subr.mxu0 0.0
    %576 = vmatpush2.msra.mxu0 0.0
    %577 = vmatprep.subr.mxu0 0.0
    %578 = vmatpush2.msra.mxu0 0.0
    %579 = vmatprep.subr.mxu0 0.0
    %580 = vmatpush2.msra.mxu0 0.0
    %581 = vmatprep.subr.mxu0 0.0
    %582 = vmatpush2.msra.mxu0 0.0
    %583 = vmatprep.subr.mxu0 0.0
    %584 = vmatpush2.msra.mxu0 0.0
    %585 = vmatprep.mubr.f32.mxu0 0.0
    %586 = vmatmul.mubr.f32.gmra.mxu0 %v519
    %v587 = vpop.f32.mrf.mxu0
    %v588 = vadd.f32 0.0, %v587
    %v589 = vpop.f32.mrf.mxu0
    %590 = vdwg.mxu0
    %v591 = vadd.f32 %v517, %v588
    %v593 = vsel %vm297, %v253, 0
    %595 = vmatprep.subr.mxu0 0.0
    %596 = vmatpush1.msra.mxu0 0.0
    %597 = vmatprep.subr.mxu0 0.0
    %598 = vmatpush1.msra.mxu0 0.0
    %599 = vmatprep.subr.mxu0 0.0
    %600 = vmatpush1.msra.mxu0 0.0
    %601 = vmatprep.subr.mxu0 0.0
    %602 = vmatpush1.msra.mxu0 0.0
    %603 = vmatprep.subr.mxu0 0.0
    %604 = vmatpush1.msra.mxu0 0.0
    %605 = vmatprep.subr.mxu0 0.0
    %606 = vmatpush1.msra.mxu0 0.0
    %607 = vmatprep.subr.mxu0 0.0
    %608 = vmatpush1.msra.mxu0 0.0
    %609 = vmatprep.subr.mxu0 0.0
    %610 = vmatpush1.msra.mxu0 0.0
    %611 = vmatprep.subr.mxu0 0.0
    %612 = vmatpush1.msra.mxu0 0.0
    %613 = vmatprep.subr.mxu0 0.0
    %614 = vmatpush1.msra.mxu0 0.0
    %615 = vmatprep.subr.mxu0 0.0
    %616 = vmatpush1.msra.mxu0 0.0
    %617 = vmatprep.subr.mxu0 0.0
    %618 = vmatpush1.msra.mxu0 0.0
    %619 = vmatprep.subr.mxu0 0.0
    %620 = vmatpush1.msra.mxu0 0.0
    %621 = vmatprep.subr.mxu0 0.0
    %622 = vmatpush1.msra.mxu0 0.0
    %623 = vmatprep.subr.mxu0 0.0
    %624 = vmatpush1.msra.mxu0 %v274
    %625 = vmatprep.subr.mxu0 0.0
    %626 = vmatpush1.msra.mxu0 %v273
    %627 = vmatprep.subr.mxu0 0.0
    %628 = vmatpush2.msra.mxu0 0.0
    %629 = vmatprep.subr.mxu0 0.0
    %630 = vmatpush2.msra.mxu0 0.0
    %631 = vmatprep.subr.mxu0 0.0
    %632 = vmatpush2.msra.mxu0 0.0
    %633 = vmatprep.subr.mxu0 0.0
    %634 = vmatpush2.msra.mxu0 0.0
    %635 = vmatprep.subr.mxu0 0.0
    %636 = vmatpush2.msra.mxu0 0.0
    %637 = vmatprep.subr.mxu0 0.0
    %638 = vmatpush2.msra.mxu0 0.0
    %639 = vmatprep.subr.mxu0 0.0
    %640 = vmatpush2.msra.mxu0 0.0
    %641 = vmatprep.subr.mxu0 0.0
    %642 = vmatpush2.msra.mxu0 0.0
    %643 = vmatprep.subr.mxu0 0.0
    %644 = vmatpush2.msra.mxu0 0.0
    %645 = vmatprep.subr.mxu0 0.0
    %646 = vmatpush2.msra.mxu0 0.0
    %647 = vmatprep.subr.mxu0 0.0
    %648 = vmatpush2.msra.mxu0 0.0
    %649 = vmatprep.subr.mxu0 0.0
    %650 = vmatpush2.msra.mxu0 0.0
    %651 = vmatprep.subr.mxu0 0.0
    %652 = vmatpush2.msra.mxu0 0.0
    %653 = vmatprep.subr.mxu0 0.0
    %654 = vmatpush2.msra.mxu0 0.0
    %655 = vmatprep.subr.mxu0 0.0
    %656 = vmatpush2.msra.mxu0 0.0
    %657 = vmatprep.subr.mxu0 0.0
    %658 = vmatpush2.msra.mxu0 0.0
    %659 = vmatprep.mubr.f32.mxu0 0.0
    %660 = vmatmul.mubr.f32.gmra.mxu0 %v593
    %v661 = vpop.f32.mrf.mxu0
    %v662 = vadd.f32 0.0, %v661
    %v663 = vpop.f32.mrf.mxu0
    %664 = vdwg.mxu0
    %v665 = vadd.f32 %v591, %v662
    %v667 = vsel %vm297, %v254, 0
    %669 = vmatprep.subr.mxu0 0.0
    %670 = vmatpush1.msra.mxu0 0.0
    %671 = vmatprep.subr.mxu0 0.0
    %672 = vmatpush1.msra.mxu0 0.0
    %673 = vmatprep.subr.mxu0 0.0
    %674 = vmatpush1.msra.mxu0 0.0
    %675 = vmatprep.subr.mxu0 0.0
    %676 = vmatpush1.msra.mxu0 0.0
    %677 = vmatprep.subr.mxu0 0.0
    %678 = vmatpush1.msra.mxu0 0.0
    %679 = vmatprep.subr.mxu0 0.0
    %680 = vmatpush1.msra.mxu0 0.0
    %681 = vmatprep.subr.mxu0 0.0
    %682 = vmatpush1.msra.mxu0 0.0
    %683 = vmatprep.subr.mxu0 0.0
    %684 = vmatpush1.msra.mxu0 0.0
    %685 = vmatprep.subr.mxu0 0.0
    %686 = vmatpush1.msra.mxu0 0.0
    %687 = vmatprep.subr.mxu0 0.0
    %688 = vmatpush1.msra.mxu0 0.0
    %689 = vmatprep.subr.mxu0 0.0
    %690 = vmatpush1.msra.mxu0 0.0
    %691 = vmatprep.subr.mxu0 0.0
    %692 = vmatpush1.msra.mxu0 0.0
    %693 = vmatprep.subr.mxu0 0.0
    %694 = vmatpush1.msra.mxu0 0.0
    %695 = vmatprep.subr.mxu0 0.0
    %696 = vmatpush1.msra.mxu0 0.0
    %697 = vmatprep.subr.mxu0 0.0
    %698 = vmatpush1.msra.mxu0 %v276
    %699 = vmatprep.subr.mxu0 0.0
    %700 = vmatpush1.msra.mxu0 %v275
    %701 = vmatprep.subr.mxu0 0.0
    %702 = vmatpush2.msra.mxu0 0.0
    %703 = vmatprep.subr.mxu0 0.0
    %704 = vmatpush2.msra.mxu0 0.0
    %705 = vmatprep.subr.mxu0 0.0
    %706 = vmatpush2.msra.mxu0 0.0
    %707 = vmatprep.subr.mxu0 0.0
    %708 = vmatpush2.msra.mxu0 0.0
    %709 = vmatprep.subr.mxu0 0.0
    %710 = vmatpush2.msra.mxu0 0.0
    %711 = vmatprep.subr.mxu0 0.0
    %712 = vmatpush2.msra.mxu0 0.0
    %713 = vmatprep.subr.mxu0 0.0
    %714 = vmatpush2.msra.mxu0 0.0
    %715 = vmatprep.subr.mxu0 0.0
    %716 = vmatpush2.msra.mxu0 0.0
    %717 = vmatprep.subr.mxu0 0.0
    %718 = vmatpush2.msra.mxu0 0.0
    %719 = vmatprep.subr.mxu0 0.0
    %720 = vmatpush2.msra.mxu0 0.0
    %721 = vmatprep.subr.mxu0 0.0
    %722 = vmatpush2.msra.mxu0 0.0
    %723 = vmatprep.subr.mxu0 0.0
    %724 = vmatpush2.msra.mxu0 0.0
    %725 = vmatprep.subr.mxu0 0.0
    %726 = vmatpush2.msra.mxu0 0.0
    %727 = vmatprep.subr.mxu0 0.0
    %728 = vmatpush2.msra.mxu0 0.0
    %729 = vmatprep.subr.mxu0 0.0
    %730 = vmatpush2.msra.mxu0 0.0
    %731 = vmatprep.subr.mxu0 0.0
    %732 = vmatpush2.msra.mxu0 0.0
    %733 = vmatprep.mubr.f32.mxu0 0.0
    %734 = vmatmul.mubr.f32.gmra.mxu0 %v667
    %v735 = vpop.f32.mrf.mxu0
    %v736 = vadd.f32 0.0, %v735
    %v737 = vpop.f32.mrf.mxu0
    %738 = vdwg.mxu0
    %v739 = vadd.f32 %v665, %v736
    %v741 = vsel %vm297, %v255, 0
    %743 = vmatprep.subr.mxu0 0.0
    %744 = vmatpush1.msra.mxu0 0.0
    %745 = vmatprep.subr.mxu0 0.0
    %746 = vmatpush1.msra.mxu0 0.0
    %747 = vmatprep.subr.mxu0 0.0
    %748 = vmatpush1.msra.mxu0 0.0
    %749 = vmatprep.subr.mxu0 0.0
    %750 = vmatpush1.msra.mxu0 0.0
    %751 = vmatprep.subr.mxu0 0.0
    %752 = vmatpush1.msra.mxu0 0.0
    %753 = vmatprep.subr.mxu0 0.0
    %754 = vmatpush1.msra.mxu0 0.0
    %755 = vmatprep.subr.mxu0 0.0
    %756 = vmatpush1.msra.mxu0 0.0
    %757 = vmatprep.subr.mxu0 0.0
    %758 = vmatpush1.msra.mxu0 0.0
    %759 = vmatprep.subr.mxu0 0.0
    %760 = vmatpush1.msra.mxu0 0.0
    %761 = vmatprep.subr.mxu0 0.0
    %762 = vmatpush1.msra.mxu0 0.0
    %763 = vmatprep.subr.mxu0 0.0
    %764 = vmatpush1.msra.mxu0 0.0
    %765 = vmatprep.subr.mxu0 0.0
    %766 = vmatpush1.msra.mxu0 0.0
    %767 = vmatprep.subr.mxu0 0.0
    %768 = vmatpush1.msra.mxu0 0.0
    %769 = vmatprep.subr.mxu0 0.0
    %770 = vmatpush1.msra.mxu0 0.0
    %771 = vmatprep.subr.mxu0 0.0
    %772 = vmatpush1.msra.mxu0 %v278
    %773 = vmatprep.subr.mxu0 0.0
    %774 = vmatpush1.msra.mxu0 %v277
    %775 = vmatprep.subr.mxu0 0.0
    %776 = vmatpush2.msra.mxu0 0.0
    %777 = vmatprep.subr.mxu0 0.0
    %778 = vmatpush2.msra.mxu0 0.0
    %779 = vmatprep.subr.mxu0 0.0
    %780 = vmatpush2.msra.mxu0 0.0
    %781 = vmatprep.subr.mxu0 0.0
    %782 = vmatpush2.msra.mxu0 0.0
    %783 = vmatprep.subr.mxu0 0.0
    %784 = vmatpush2.msra.mxu0 0.0
    %785 = vmatprep.subr.mxu0 0.0
    %786 = vmatpush2.msra.mxu0 0.0
    %787 = vmatprep.subr.mxu0 0.0
    %788 = vmatpush2.msra.mxu0 0.0
    %789 = vmatprep.subr.mxu0 0.0
    %790 = vmatpush2.msra.mxu0 0.0
    %791 = vmatprep.subr.mxu0 0.0
    %792 = vmatpush2.msra.mxu0 0.0
    %793 = vmatprep.subr.mxu0 0.0
    %794 = vmatpush2.msra.mxu0 0.0
    %795 = vmatprep.subr.mxu0 0.0
    %796 = vmatpush2.msra.mxu0 0.0
    %797 = vmatprep.subr.mxu0 0.0
    %798 = vmatpush2.msra.mxu0 0.0
    %799 = vmatprep.subr.mxu0 0.0
    %800 = vmatpush2.msra.mxu0 0.0
    %801 = vmatprep.subr.mxu0 0.0
    %802 = vmatpush2.msra.mxu0 0.0
    %803 = vmatprep.subr.mxu0 0.0
    %804 = vmatpush2.msra.mxu0 0.0
    %805 = vmatprep.subr.mxu0 0.0
    %806 = vmatpush2.msra.mxu0 0.0
    %807 = vmatprep.mubr.f32.mxu0 0.0
    %808 = vmatmul.mubr.f32.gmra.mxu0 %v741
    %v809 = vpop.f32.mrf.mxu0
    %v810 = vadd.f32 0.0, %v809
    %v811 = vpop.f32.mrf.mxu0
    %812 = vdwg.mxu0
    %v813 = vadd.f32 %v739, %v810
    %v815 = vsel %vm297, %v256, 0
    %817 = vmatprep.subr.mxu0 0.0
    %818 = vmatpush1.msra.mxu0 0.0
    %819 = vmatprep.subr.mxu0 0.0
    %820 = vmatpush1.msra.mxu0 0.0
    %821 = vmatprep.subr.mxu0 0.0
    %822 = vmatpush1.msra.mxu0 0.0
    %823 = vmatprep.subr.mxu0 0.0
    %824 = vmatpush1.msra.mxu0 0.0
    %825 = vmatprep.subr.mxu0 0.0
    %826 = vmatpush1.msra.mxu0 0.0
    %827 = vmatprep.subr.mxu0 0.0
    %828 = vmatpush1.msra.mxu0 0.0
    %829 = vmatprep.subr.mxu0 0.0
    %830 = vmatpush1.msra.mxu0 0.0
    %831 = vmatprep.subr.mxu0 0.0
    %832 = vmatpush1.msra.mxu0 0.0
    %833 = vmatprep.subr.mxu0 0.0
    %834 = vmatpush1.msra.mxu0 0.0
    %835 = vmatprep.subr.mxu0 0.0
    %836 = vmatpush1.msra.mxu0 0.0
    %837 = vmatprep.subr.mxu0 0.0
    %838 = vmatpush1.msra.mxu0 0.0
    %839 = vmatprep.subr.mxu0 0.0
    %840 = vmatpush1.msra.mxu0 0.0
    %841 = vmatprep.subr.mxu0 0.0
    %842 = vmatpush1.msra.mxu0 0.0
    %843 = vmatprep.subr.mxu0 0.0
    %844 = vmatpush1.msra.mxu0 0.0
    %845 = vmatprep.subr.mxu0 0.0
    %846 = vmatpush1.msra.mxu0 %v280
    %847 = vmatprep.subr.mxu0 0.0
    %848 = vmatpush1.msra.mxu0 %v279
    %849 = vmatprep.subr.mxu0 0.0
    %850 = vmatpush2.msra.mxu0 0.0
    %851 = vmatprep.subr.mxu0 0.0
    %852 = vmatpush2.msra.mxu0 0.0
    %853 = vmatprep.subr.mxu0 0.0
    %854 = vmatpush2.msra.mxu0 0.0
    %855 = vmatprep.subr.mxu0 0.0
    %856 = vmatpush2.msra.mxu0 0.0
    %857 = vmatprep.subr.mxu0 0.0
    %858 = vmatpush2.msra.mxu0 0.0
    %859 = vmatprep.subr.mxu0 0.0
    %860 = vmatpush2.msra.mxu0 0.0
    %861 = vmatprep.subr.mxu0 0.0
    %862 = vmatpush2.msra.mxu0 0.0
    %863 = vmatprep.subr.mxu0 0.0
    %864 = vmatpush2.msra.mxu0 0.0
    %865 = vmatprep.subr.mxu0 0.0
    %866 = vmatpush2.msra.mxu0 0.0
    %867 = vmatprep.subr.mxu0 0.0
    %868 = vmatpush2.msra.mxu0 0.0
    %869 = vmatprep.subr.mxu0 0.0
    %870 = vmatpush2.msra.mxu0 0.0
    %871 = vmatprep.subr.mxu0 0.0
    %872 = vmatpush2.msra.mxu0 0.0
    %873 = vmatprep.subr.mxu0 0.0
    %874 = vmatpush2.msra.mxu0 0.0
    %875 = vmatprep.subr.mxu0 0.0
    %876 = vmatpush2.msra.mxu0 0.0
    %877 = vmatprep.subr.mxu0 0.0
    %878 = vmatpush2.msra.mxu0 0.0
    %879 = vmatprep.subr.mxu0 0.0
    %880 = vmatpush2.msra.mxu0 0.0
    %881 = vmatprep.mubr.f32.mxu0 0.0
    %882 = vmatmul.mubr.f32.gmra.mxu0 %v815
    %v883 = vpop.f32.mrf.mxu0
    %v884 = vadd.f32 0.0, %v883
    %v885 = vpop.f32.mrf.mxu0
    %886 = vdwg.mxu0
    %v887 = vadd.f32 %v813, %v884
    %v889 = vsel %vm297, %v257, 0
    %891 = vmatprep.subr.mxu0 0.0
    %892 = vmatpush1.msra.mxu0 0.0
    %893 = vmatprep.subr.mxu0 0.0
    %894 = vmatpush1.msra.mxu0 0.0
    %895 = vmatprep.subr.mxu0 0.0
    %896 = vmatpush1.msra.mxu0 0.0
    %897 = vmatprep.subr.mxu0 0.0
    %898 = vmatpush1.msra.mxu0 0.0
    %899 = vmatprep.subr.mxu0 0.0
    %900 = vmatpush1.msra.mxu0 0.0
    %901 = vmatprep.subr.mxu0 0.0
    %902 = vmatpush1.msra.mxu0 0.0
    %903 = vmatprep.subr.mxu0 0.0
    %904 = vmatpush1.msra.mxu0 0.0
    %905 = vmatprep.subr.mxu0 0.0
    %906 = vmatpush1.msra.mxu0 0.0
    %907 = vmatprep.subr.mxu0 0.0
    %908 = vmatpush1.msra.mxu0 0.0
    %909 = vmatprep.subr.mxu0 0.0
    %910 = vmatpush1.msra.mxu0 0.0
    %911 = vmatprep.subr.mxu0 0.0
    %912 = vmatpush1.msra.mxu0 0.0
    %913 = vmatprep.subr.mxu0 0.0
    %914 = vmatpush1.msra.mxu0 0.0
    %915 = vmatprep.subr.mxu0 0.0
    %916 = vmatpush1.msra.mxu0 0.0
    %917 = vmatprep.subr.mxu0 0.0
    %918 = vmatpush1.msra.mxu0 0.0
    %919 = vmatprep.subr.mxu0 0.0
    %920 = vmatpush1.msra.mxu0 %v282
    %921 = vmatprep.subr.mxu0 0.0
    %922 = vmatpush1.msra.mxu0 %v281
    %923 = vmatprep.subr.mxu0 0.0
    %924 = vmatpush2.msra.mxu0 0.0
    %925 = vmatprep.subr.mxu0 0.0
    %926 = vmatpush2.msra.mxu0 0.0
    %927 = vmatprep.subr.mxu0 0.0
    %928 = vmatpush2.msra.mxu0 0.0
    %929 = vmatprep.subr.mxu0 0.0
    %930 = vmatpush2.msra.mxu0 0.0
    %931 = vmatprep.subr.mxu0 0.0
    %932 = vmatpush2.msra.mxu0 0.0
    %933 = vmatprep.subr.mxu0 0.0
    %934 = vmatpush2.msra.mxu0 0.0
    %935 = vmatprep.subr.mxu0 0.0
    %936 = vmatpush2.msra.mxu0 0.0
    %937 = vmatprep.subr.mxu0 0.0
    %938 = vmatpush2.msra.mxu0 0.0
    %939 = vmatprep.subr.mxu0 0.0
    %940 = vmatpush2.msra.mxu0 0.0
    %941 = vmatprep.subr.mxu0 0.0
    %942 = vmatpush2.msra.mxu0 0.0
    %943 = vmatprep.subr.mxu0 0.0
    %944 = vmatpush2.msra.mxu0 0.0
    %945 = vmatprep.subr.mxu0 0.0
    %946 = vmatpush2.msra.mxu0 0.0
    %947 = vmatprep.subr.mxu0 0.0
    %948 = vmatpush2.msra.mxu0 0.0
    %949 = vmatprep.subr.mxu0 0.0
    %950 = vmatpush2.msra.mxu0 0.0
    %951 = vmatprep.subr.mxu0 0.0
    %952 = vmatpush2.msra.mxu0 0.0
    %953 = vmatprep.subr.mxu0 0.0
    %954 = vmatpush2.msra.mxu0 0.0
    %955 = vmatprep.mubr.f32.mxu0 0.0
    %956 = vmatmul.mubr.f32.gmra.mxu0 %v889
    %v957 = vpop.f32.mrf.mxu0
    %v958 = vadd.f32 0.0, %v957
    %v959 = vpop.f32.mrf.mxu0
    %960 = vdwg.mxu0
    %v961 = vadd.f32 %v887, %v958
    %v963 = vsel %vm297, %v258, 0
    %965 = vmatprep.subr.mxu0 0.0
    %966 = vmatpush1.msra.mxu0 0.0
    %967 = vmatprep.subr.mxu0 0.0
    %968 = vmatpush1.msra.mxu0 0.0
    %969 = vmatprep.subr.mxu0 0.0
    %970 = vmatpush1.msra.mxu0 0.0
    %971 = vmatprep.subr.mxu0 0.0
    %972 = vmatpush1.msra.mxu0 0.0
    %973 = vmatprep.subr.mxu0 0.0
    %974 = vmatpush1.msra.mxu0 0.0
    %975 = vmatprep.subr.mxu0 0.0
    %976 = vmatpush1.msra.mxu0 0.0
    %977 = vmatprep.subr.mxu0 0.0
    %978 = vmatpush1.msra.mxu0 0.0
    %979 = vmatprep.subr.mxu0 0.0
    %980 = vmatpush1.msra.mxu0 0.0
    %981 = vmatprep.subr.mxu0 0.0
    %982 = vmatpush1.msra.mxu0 0.0
    %983 = vmatprep.subr.mxu0 0.0
    %984 = vmatpush1.msra.mxu0 0.0
    %985 = vmatprep.subr.mxu0 0.0
    %986 = vmatpush1.msra.mxu0 0.0
    %987 = vmatprep.subr.mxu0 0.0
    %988 = vmatpush1.msra.mxu0 0.0
    %989 = vmatprep.subr.mxu0 0.0
    %990 = vmatpush1.msra.mxu0 0.0
    %991 = vmatprep.subr.mxu0 0.0
    %992 = vmatpush1.msra.mxu0 0.0
    %993 = vmatprep.subr.mxu0 0.0
    %994 = vmatpush1.msra.mxu0 %v284
    %995 = vmatprep.subr.mxu0 0.0
    %996 = vmatpush1.msra.mxu0 %v283
    %997 = vmatprep.subr.mxu0 0.0
    %998 = vmatpush2.msra.mxu0 0.0
    %999 = vmatprep.subr.mxu0 0.0
    %1000 = vmatpush2.msra.mxu0 0.0
    %1001 = vmatprep.subr.mxu0 0.0
    %1002 = vmatpush2.msra.mxu0 0.0
    %1003 = vmatprep.subr.mxu0 0.0
    %1004 = vmatpush2.msra.mxu0 0.0
    %1005 = vmatprep.subr.mxu0 0.0
    %1006 = vmatpush2.msra.mxu0 0.0
    %1007 = vmatprep.subr.mxu0 0.0
    %1008 = vmatpush2.msra.mxu0 0.0
    %1009 = vmatprep.subr.mxu0 0.0
    %1010 = vmatpush2.msra.mxu0 0.0
    %1011 = vmatprep.subr.mxu0 0.0
    %1012 = vmatpush2.msra.mxu0 0.0
    %1013 = vmatprep.subr.mxu0 0.0
    %1014 = vmatpush2.msra.mxu0 0.0
    %1015 = vmatprep.subr.mxu0 0.0
    %1016 = vmatpush2.msra.mxu0 0.0
    %1017 = vmatprep.subr.mxu0 0.0
    %1018 = vmatpush2.msra.mxu0 0.0
    %1019 = vmatprep.subr.mxu0 0.0
    %1020 = vmatpush2.msra.mxu0 0.0
    %1021 = vmatprep.subr.mxu0 0.0
    %1022 = vmatpush2.msra.mxu0 0.0
    %1023 = vmatprep.subr.mxu0 0.0
    %1024 = vmatpush2.msra.mxu0 0.0
    %1025 = vmatprep.subr.mxu0 0.0
    %1026 = vmatpush2.msra.mxu0 0.0
    %1027 = vmatprep.subr.mxu0 0.0
    %1028 = vmatpush2.msra.mxu0 0.0
    %1029 = vmatprep.mubr.f32.mxu0 0.0
    %1030 = vmatmul.mubr.f32.gmra.mxu0 %v963
    %v1031 = vpop.f32.mrf.mxu0
    %v1032 = vadd.f32 0.0, %v1031
    %v1033 = vpop.f32.mrf.mxu0
    %1034 = vdwg.mxu0
    %v1035 = vadd.f32 %v961, %v1032
    %v1037 = vsel %vm297, %v259, 0
    %1039 = vmatprep.subr.mxu0 0.0
    %1040 = vmatpush1.msra.mxu0 0.0
    %1041 = vmatprep.subr.mxu0 0.0
    %1042 = vmatpush1.msra.mxu0 0.0
    %1043 = vmatprep.subr.mxu0 0.0
    %1044 = vmatpush1.msra.mxu0 0.0
    %1045 = vmatprep.subr.mxu0 0.0
    %1046 = vmatpush1.msra.mxu0 0.0
    %1047 = vmatprep.subr.mxu0 0.0
    %1048 = vmatpush1.msra.mxu0 0.0
    %1049 = vmatprep.subr.mxu0 0.0
    %1050 = vmatpush1.msra.mxu0 0.0
    %1051 = vmatprep.subr.mxu0 0.0
    %1052 = vmatpush1.msra.mxu0 0.0
    %1053 = vmatprep.subr.mxu0 0.0
    %1054 = vmatpush1.msra.mxu0 0.0
    %1055 = vmatprep.subr.mxu0 0.0
    %1056 = vmatpush1.msra.mxu0 0.0
    %1057 = vmatprep.subr.mxu0 0.0
    %1058 = vmatpush1.msra.mxu0 0.0
    %1059 = vmatprep.subr.mxu0 0.0
    %1060 = vmatpush1.msra.mxu0 0.0
    %1061 = vmatprep.subr.mxu0 0.0
    %1062 = vmatpush1.msra.mxu0 0.0
    %1063 = vmatprep.subr.mxu0 0.0
    %1064 = vmatpush1.msra.mxu0 0.0
    %1065 = vmatprep.subr.mxu0 0.0
    %1066 = vmatpush1.msra.mxu0 0.0
    %1067 = vmatprep.subr.mxu0 0.0
    %1068 = vmatpush1.msra.mxu0 %v286
    %1069 = vmatprep.subr.mxu0 0.0
    %1070 = vmatpush1.msra.mxu0 %v285
    %1071 = vmatprep.subr.mxu0 0.0
    %1072 = vmatpush2.msra.mxu0 0.0
    %1073 = vmatprep.subr.mxu0 0.0
    %1074 = vmatpush2.msra.mxu0 0.0
    %1075 = vmatprep.subr.mxu0 0.0
    %1076 = vmatpush2.msra.mxu0 0.0
    %1077 = vmatprep.subr.mxu0 0.0
    %1078 = vmatpush2.msra.mxu0 0.0
    %1079 = vmatprep.subr.mxu0 0.0
    %1080 = vmatpush2.msra.mxu0 0.0
    %1081 = vmatprep.subr.mxu0 0.0
    %1082 = vmatpush2.msra.mxu0 0.0
    %1083 = vmatprep.subr.mxu0 0.0
    %1084 = vmatpush2.msra.mxu0 0.0
    %1085 = vmatprep.subr.mxu0 0.0
    %1086 = vmatpush2.msra.mxu0 0.0
    %1087 = vmatprep.subr.mxu0 0.0
    %1088 = vmatpush2.msra.mxu0 0.0
    %1089 = vmatprep.subr.mxu0 0.0
    %1090 = vmatpush2.msra.mxu0 0.0
    %1091 = vmatprep.subr.mxu0 0.0
    %1092 = vmatpush2.msra.mxu0 0.0
    %1093 = vmatprep.subr.mxu0 0.0
    %1094 = vmatpush2.msra.mxu0 0.0
    %1095 = vmatprep.subr.mxu0 0.0
    %1096 = vmatpush2.msra.mxu0 0.0
    %1097 = vmatprep.subr.mxu0 0.0
    %1098 = vmatpush2.msra.mxu0 0.0
    %1099 = vmatprep.subr.mxu0 0.0
    %1100 = vmatpush2.msra.mxu0 0.0
    %1101 = vmatprep.subr.mxu0 0.0
    %1102 = vmatpush2.msra.mxu0 0.0
    %1103 = vmatprep.mubr.f32.mxu0 0.0
    %1104 = vmatmul.mubr.f32.gmra.mxu0 %v1037
    %v1105 = vpop.f32.mrf.mxu0
    %v1106 = vadd.f32 0.0, %v1105
    %v1107 = vpop.f32.mrf.mxu0
    %1108 = vdwg.mxu0
    %v1109 = vadd.f32 %v1035, %v1106
    %v1111 = vsel %vm297, %v260, 0
    %1113 = vmatprep.subr.mxu0 0.0
    %1114 = vmatpush1.msra.mxu0 0.0
    %1115 = vmatprep.subr.mxu0 0.0
    %1116 = vmatpush1.msra.mxu0 0.0
    %1117 = vmatprep.subr.mxu0 0.0
    %1118 = vmatpush1.msra.mxu0 0.0
    %1119 = vmatprep.subr.mxu0 0.0
    %1120 = vmatpush1.msra.mxu0 0.0
    %1121 = vmatprep.subr.mxu0 0.0
    %1122 = vmatpush1.msra.mxu0 0.0
    %1123 = vmatprep.subr.mxu0 0.0
    %1124 = vmatpush1.msra.mxu0 0.0
    %1125 = vmatprep.subr.mxu0 0.0
    %1126 = vmatpush1.msra.mxu0 0.0
    %1127 = vmatprep.subr.mxu0 0.0
    %1128 = vmatpush1.msra.mxu0 0.0
    %1129 = vmatprep.subr.mxu0 0.0
    %1130 = vmatpush1.msra.mxu0 0.0
    %1131 = vmatprep.subr.mxu0 0.0
    %1132 = vmatpush1.msra.mxu0 0.0
    %1133 = vmatprep.subr.mxu0 0.0
    %1134 = vmatpush1.msra.mxu0 0.0
    %1135 = vmatprep.subr.mxu0 0.0
    %1136 = vmatpush1.msra.mxu0 0.0
    %1137 = vmatprep.subr.mxu0 0.0
    %1138 = vmatpush1.msra.mxu0 0.0
    %1139 = vmatprep.subr.mxu0 0.0
    %1140 = vmatpush1.msra.mxu0 0.0
    %1141 = vmatprep.subr.mxu0 0.0
    %1142 = vmatpush1.msra.mxu0 %v288
    %1143 = vmatprep.subr.mxu0 0.0
    %1144 = vmatpush1.msra.mxu0 %v287
    %1145 = vmatprep.subr.mxu0 0.0
    %1146 = vmatpush2.msra.mxu0 0.0
    %1147 = vmatprep.subr.mxu0 0.0
    %1148 = vmatpush2.msra.mxu0 0.0
    %1149 = vmatprep.subr.mxu0 0.0
    %1150 = vmatpush2.msra.mxu0 0.0
    %1151 = vmatprep.subr.mxu0 0.0
    %1152 = vmatpush2.msra.mxu0 0.0
    %1153 = vmatprep.subr.mxu0 0.0
    %1154 = vmatpush2.msra.mxu0 0.0
    %1155 = vmatprep.subr.mxu0 0.0
    %1156 = vmatpush2.msra.mxu0 0.0
    %1157 = vmatprep.subr.mxu0 0.0
    %1158 = vmatpush2.msra.mxu0 0.0
    %1159 = vmatprep.subr.mxu0 0.0
    %1160 = vmatpush2.msra.mxu0 0.0
    %1161 = vmatprep.subr.mxu0 0.0
    %1162 = vmatpush2.msra.mxu0 0.0
    %1163 = vmatprep.subr.mxu0 0.0
    %1164 = vmatpush2.msra.mxu0 0.0
    %1165 = vmatprep.subr.mxu0 0.0
    %1166 = vmatpush2.msra.mxu0 0.0
    %1167 = vmatprep.subr.mxu0 0.0
    %1168 = vmatpush2.msra.mxu0 0.0
    %1169 = vmatprep.subr.mxu0 0.0
    %1170 = vmatpush2.msra.mxu0 0.0
    %1171 = vmatprep.subr.mxu0 0.0
    %1172 = vmatpush2.msra.mxu0 0.0
    %1173 = vmatprep.subr.mxu0 0.0
    %1174 = vmatpush2.msra.mxu0 0.0
    %1175 = vmatprep.subr.mxu0 0.0
    %1176 = vmatpush2.msra.mxu0 0.0
    %1177 = vmatprep.mubr.f32.mxu0 0.0
    %1178 = vmatmul.mubr.f32.gmra.mxu0 %v1111
    %v1179 = vpop.f32.mrf.mxu0
    %v1180 = vadd.f32 0.0, %v1179
    %v1181 = vpop.f32.mrf.mxu0
    %1182 = vdwg.mxu0
    %v1183 = vadd.f32 %v1109, %v1180
    %v1185 = vsel %vm297, %v261, 0
    %1187 = vmatprep.subr.mxu0 0.0
    %1188 = vmatpush1.msra.mxu0 0.0
    %1189 = vmatprep.subr.mxu0 0.0
    %1190 = vmatpush1.msra.mxu0 0.0
    %1191 = vmatprep.subr.mxu0 0.0
    %1192 = vmatpush1.msra.mxu0 0.0
    %1193 = vmatprep.subr.mxu0 0.0
    %1194 = vmatpush1.msra.mxu0 0.0
    %1195 = vmatprep.subr.mxu0 0.0
    %1196 = vmatpush1.msra.mxu0 0.0
    %1197 = vmatprep.subr.mxu0 0.0
    %1198 = vmatpush1.msra.mxu0 0.0
    %1199 = vmatprep.subr.mxu0 0.0
    %1200 = vmatpush1.msra.mxu0 0.0
    %1201 = vmatprep.subr.mxu0 0.0
    %1202 = vmatpush1.msra.mxu0 0.0
    %1203 = vmatprep.subr.mxu0 0.0
    %1204 = vmatpush1.msra.mxu0 0.0
    %1205 = vmatprep.subr.mxu0 0.0
    %1206 = vmatpush1.msra.mxu0 0.0
    %1207 = vmatprep.subr.mxu0 0.0
    %1208 = vmatpush1.msra.mxu0 0.0
    %1209 = vmatprep.subr.mxu0 0.0
    %1210 = vmatpush1.msra.mxu0 0.0
    %1211 = vmatprep.subr.mxu0 0.0
    %1212 = vmatpush1.msra.mxu0 0.0
    %1213 = vmatprep.subr.mxu0 0.0
    %1214 = vmatpush1.msra.mxu0 0.0
    %1215 = vmatprep.subr.mxu0 0.0
    %1216 = vmatpush1.msra.mxu0 %v290
    %1217 = vmatprep.subr.mxu0 0.0
    %1218 = vmatpush1.msra.mxu0 %v289
    %1219 = vmatprep.subr.mxu0 0.0
    %1220 = vmatpush2.msra.mxu0 0.0
    %1221 = vmatprep.subr.mxu0 0.0
    %1222 = vmatpush2.msra.mxu0 0.0
    %1223 = vmatprep.subr.mxu0 0.0
    %1224 = vmatpush2.msra.mxu0 0.0
    %1225 = vmatprep.subr.mxu0 0.0
    %1226 = vmatpush2.msra.mxu0 0.0
    %1227 = vmatprep.subr.mxu0 0.0
    %1228 = vmatpush2.msra.mxu0 0.0
    %1229 = vmatprep.subr.mxu0 0.0
    %1230 = vmatpush2.msra.mxu0 0.0
    %1231 = vmatprep.subr.mxu0 0.0
    %1232 = vmatpush2.msra.mxu0 0.0
    %1233 = vmatprep.subr.mxu0 0.0
    %1234 = vmatpush2.msra.mxu0 0.0
    %1235 = vmatprep.subr.mxu0 0.0
    %1236 = vmatpush2.msra.mxu0 0.0
    %1237 = vmatprep.subr.mxu0 0.0
    %1238 = vmatpush2.msra.mxu0 0.0
    %1239 = vmatprep.subr.mxu0 0.0
    %1240 = vmatpush2.msra.mxu0 0.0
    %1241 = vmatprep.subr.mxu0 0.0
    %1242 = vmatpush2.msra.mxu0 0.0
    %1243 = vmatprep.subr.mxu0 0.0
    %1244 = vmatpush2.msra.mxu0 0.0
    %1245 = vmatprep.subr.mxu0 0.0
    %1246 = vmatpush2.msra.mxu0 0.0
    %1247 = vmatprep.subr.mxu0 0.0
    %1248 = vmatpush2.msra.mxu0 0.0
    %1249 = vmatprep.subr.mxu0 0.0
    %1250 = vmatpush2.msra.mxu0 0.0
    %1251 = vmatprep.mubr.f32.mxu0 0.0
    %1252 = vmatmul.mubr.f32.gmra.mxu0 %v1185
    %v1253 = vpop.f32.mrf.mxu0
    %v1254 = vadd.f32 0.0, %v1253
    %v1255 = vpop.f32.mrf.mxu0
    %1256 = vdwg.mxu0
    %v1257 = vadd.f32 %v1183, %v1254
    %v1259 = vsel %vm297, %v262, 0
    %1261 = vmatprep.subr.mxu0 0.0
    %1262 = vmatpush1.msra.mxu0 0.0
    %1263 = vmatprep.subr.mxu0 0.0
    %1264 = vmatpush1.msra.mxu0 0.0
    %1265 = vmatprep.subr.mxu0 0.0
    %1266 = vmatpush1.msra.mxu0 0.0
    %1267 = vmatprep.subr.mxu0 0.0
    %1268 = vmatpush1.msra.mxu0 0.0
    %1269 = vmatprep.subr.mxu0 0.0
    %1270 = vmatpush1.msra.mxu0 0.0
    %1271 = vmatprep.subr.mxu0 0.0
    %1272 = vmatpush1.msra.mxu0 0.0
    %1273 = vmatprep.subr.mxu0 0.0
    %1274 = vmatpush1.msra.mxu0 0.0
    %1275 = vmatprep.subr.mxu0 0.0
    %1276 = vmatpush1.msra.mxu0 0.0
    %1277 = vmatprep.subr.mxu0 0.0
    %1278 = vmatpush1.msra.mxu0 0.0
    %1279 = vmatprep.subr.mxu0 0.0
    %1280 = vmatpush1.msra.mxu0 0.0
    %1281 = vmatprep.subr.mxu0 0.0
    %1282 = vmatpush1.msra.mxu0 0.0
    %1283 = vmatprep.subr.mxu0 0.0
    %1284 = vmatpush1.msra.mxu0 0.0
    %1285 = vmatprep.subr.mxu0 0.0
    %1286 = vmatpush1.msra.mxu0 0.0
    %1287 = vmatprep.subr.mxu0 0.0
    %1288 = vmatpush1.msra.mxu0 0.0
    %1289 = vmatprep.subr.mxu0 0.0
    %1290 = vmatpush1.msra.mxu0 %v292
    %1291 = vmatprep.subr.mxu0 0.0
    %1292 = vmatpush1.msra.mxu0 %v291
    %1293 = vmatprep.subr.mxu0 0.0
    %1294 = vmatpush2.msra.mxu0 0.0
    %1295 = vmatprep.subr.mxu0 0.0
    %1296 = vmatpush2.msra.mxu0 0.0
    %1297 = vmatprep.subr.mxu0 0.0
    %1298 = vmatpush2.msra.mxu0 0.0
    %1299 = vmatprep.subr.mxu0 0.0
    %1300 = vmatpush2.msra.mxu0 0.0
    %1301 = vmatprep.subr.mxu0 0.0
    %1302 = vmatpush2.msra.mxu0 0.0
    %1303 = vmatprep.subr.mxu0 0.0
    %1304 = vmatpush2.msra.mxu0 0.0
    %1305 = vmatprep.subr.mxu0 0.0
    %1306 = vmatpush2.msra.mxu0 0.0
    %1307 = vmatprep.subr.mxu0 0.0
    %1308 = vmatpush2.msra.mxu0 0.0
    %1309 = vmatprep.subr.mxu0 0.0
    %1310 = vmatpush2.msra.mxu0 0.0
    %1311 = vmatprep.subr.mxu0 0.0
    %1312 = vmatpush2.msra.mxu0 0.0
    %1313 = vmatprep.subr.mxu0 0.0
    %1314 = vmatpush2.msra.mxu0 0.0
    %1315 = vmatprep.subr.mxu0 0.0
    %1316 = vmatpush2.msra.mxu0 0.0
    %1317 = vmatprep.subr.mxu0 0.0
    %1318 = vmatpush2.msra.mxu0 0.0
    %1319 = vmatprep.subr.mxu0 0.0
    %1320 = vmatpush2.msra.mxu0 0.0
    %1321 = vmatprep.subr.mxu0 0.0
    %1322 = vmatpush2.msra.mxu0 0.0
    %1323 = vmatprep.subr.mxu0 0.0
    %1324 = vmatpush2.msra.mxu0 0.0
    %1325 = vmatprep.mubr.f32.mxu0 0.0
    %1326 = vmatmul.mubr.f32.gmra.mxu0 %v1259
    %v1327 = vpop.f32.mrf.mxu0
    %v1328 = vadd.f32 0.0, %v1327
    %v1329 = vpop.f32.mrf.mxu0
    %1330 = vdwg.mxu0
    %v1331 = vadd.f32 %v1257, %v1328
    %v1333 = vsel %vm297, %v263, 0
    %1335 = vmatprep.subr.mxu0 0.0
    %1336 = vmatpush1.msra.mxu0 0.0
    %1337 = vmatprep.subr.mxu0 0.0
    %1338 = vmatpush1.msra.mxu0 0.0
    %1339 = vmatprep.subr.mxu0 0.0
    %1340 = vmatpush1.msra.mxu0 0.0
    %1341 = vmatprep.subr.mxu0 0.0
    %1342 = vmatpush1.msra.mxu0 0.0
    %1343 = vmatprep.subr.mxu0 0.0
    %1344 = vmatpush1.msra.mxu0 0.0
    %1345 = vmatprep.subr.mxu0 0.0
    %1346 = vmatpush1.msra.mxu0 0.0
    %1347 = vmatprep.subr.mxu0 0.0
    %1348 = vmatpush1.msra.mxu0 0.0
    %1349 = vmatprep.subr.mxu0 0.0
    %1350 = vmatpush1.msra.mxu0 0.0
    %1351 = vmatprep.subr.mxu0 0.0
    %1352 = vmatpush1.msra.mxu0 0.0
    %1353 = vmatprep.subr.mxu0 0.0
    %1354 = vmatpush1.msra.mxu0 0.0
    %1355 = vmatprep.subr.mxu0 0.0
    %1356 = vmatpush1.msra.mxu0 0.0
    %1357 = vmatprep.subr.mxu0 0.0
    %1358 = vmatpush1.msra.mxu0 0.0
    %1359 = vmatprep.subr.mxu0 0.0
    %1360 = vmatpush1.msra.mxu0 0.0
    %1361 = vmatprep.subr.mxu0 0.0
    %1362 = vmatpush1.msra.mxu0 0.0
    %1363 = vmatprep.subr.mxu0 0.0
    %1364 = vmatpush1.msra.mxu0 %v294
    %1365 = vmatprep.subr.mxu0 0.0
    %1366 = vmatpush1.msra.mxu0 %v293
    %1367 = vmatprep.subr.mxu0 0.0
    %1368 = vmatpush2.msra.mxu0 0.0
    %1369 = vmatprep.subr.mxu0 0.0
    %1370 = vmatpush2.msra.mxu0 0.0
    %1371 = vmatprep.subr.mxu0 0.0
    %1372 = vmatpush2.msra.mxu0 0.0
    %1373 = vmatprep.subr.mxu0 0.0
    %1374 = vmatpush2.msra.mxu0 0.0
    %1375 = vmatprep.subr.mxu0 0.0
    %1376 = vmatpush2.msra.mxu0 0.0
    %1377 = vmatprep.subr.mxu0 0.0
    %1378 = vmatpush2.msra.mxu0 0.0
    %1379 = vmatprep.subr.mxu0 0.0
    %1380 = vmatpush2.msra.mxu0 0.0
    %1381 = vmatprep.subr.mxu0 0.0
    %1382 = vmatpush2.msra.mxu0 0.0
    %1383 = vmatprep.subr.mxu0 0.0
    %1384 = vmatpush2.msra.mxu0 0.0
    %1385 = vmatprep.subr.mxu0 0.0
    %1386 = vmatpush2.msra.mxu0 0.0
    %1387 = vmatprep.subr.mxu0 0.0
    %1388 = vmatpush2.msra.mxu0 0.0
    %1389 = vmatprep.subr.mxu0 0.0
    %1390 = vmatpush2.msra.mxu0 0.0
    %1391 = vmatprep.subr.mxu0 0.0
    %1392 = vmatpush2.msra.mxu0 0.0
    %1393 = vmatprep.subr.mxu0 0.0
    %1394 = vmatpush2.msra.mxu0 0.0
    %1395 = vmatprep.subr.mxu0 0.0
    %1396 = vmatpush2.msra.mxu0 0.0
    %1397 = vmatprep.subr.mxu0 0.0
    %1398 = vmatpush2.msra.mxu0 0.0
    %1399 = vmatprep.mubr.f32.mxu0 0.0
    %1400 = vmatmul.mubr.f32.gmra.mxu0 %v1333
    %v1401 = vpop.f32.mrf.mxu0
    %v1402 = vadd.f32 0.0, %v1401
    %v1403 = vpop.f32.mrf.mxu0
    %1404 = vdwg.mxu0
    %v1405 = vadd.f32 %v1331, %v1402
    %v1407 = vsel %vm297, %v264, 0
    %1409 = vmatprep.subr.mxu0 0.0
    %1410 = vmatpush1.msra.mxu0 0.0
    %1411 = vmatprep.subr.mxu0 0.0
    %1412 = vmatpush1.msra.mxu0 0.0
    %1413 = vmatprep.subr.mxu0 0.0
    %1414 = vmatpush1.msra.mxu0 0.0
    %1415 = vmatprep.subr.mxu0 0.0
    %1416 = vmatpush1.msra.mxu0 0.0
    %1417 = vmatprep.subr.mxu0 0.0
    %1418 = vmatpush1.msra.mxu0 0.0
    %1419 = vmatprep.subr.mxu0 0.0
    %1420 = vmatpush1.msra.mxu0 0.0
    %1421 = vmatprep.subr.mxu0 0.0
    %1422 = vmatpush1.msra.mxu0 0.0
    %1423 = vmatprep.subr.mxu0 0.0
    %1424 = vmatpush1.msra.mxu0 0.0
    %1425 = vmatprep.subr.mxu0 0.0
    %1426 = vmatpush1.msra.mxu0 0.0
    %1427 = vmatprep.subr.mxu0 0.0
    %1428 = vmatpush1.msra.mxu0 0.0
    %1429 = vmatprep.subr.mxu0 0.0
    %1430 = vmatpush1.msra.mxu0 0.0
    %1431 = vmatprep.subr.mxu0 0.0
    %1432 = vmatpush1.msra.mxu0 0.0
    %1433 = vmatprep.subr.mxu0 0.0
    %1434 = vmatpush1.msra.mxu0 0.0
    %1435 = vmatprep.subr.mxu0 0.0
    %1436 = vmatpush1.msra.mxu0 0.0
    %1437 = vmatprep.subr.mxu0 0.0
    %1438 = vmatpush1.msra.mxu0 %v296
    %1439 = vmatprep.subr.mxu0 0.0
    %1440 = vmatpush1.msra.mxu0 %v295
    %1441 = vmatprep.subr.mxu0 0.0
    %1442 = vmatpush2.msra.mxu0 0.0
    %1443 = vmatprep.subr.mxu0 0.0
    %1444 = vmatpush2.msra.mxu0 0.0
    %1445 = vmatprep.subr.mxu0 0.0
    %1446 = vmatpush2.msra.mxu0 0.0
    %1447 = vmatprep.subr.mxu0 0.0
    %1448 = vmatpush2.msra.mxu0 0.0
    %1449 = vmatprep.subr.mxu0 0.0
    %1450 = vmatpush2.msra.mxu0 0.0
    %1451 = vmatprep.subr.mxu0 0.0
    %1452 = vmatpush2.msra.mxu0 0.0
    %1453 = vmatprep.subr.mxu0 0.0
    %1454 = vmatpush2.msra.mxu0 0.0
    %1455 = vmatprep.subr.mxu0 0.0
    %1456 = vmatpush2.msra.mxu0 0.0
    %1457 = vmatprep.subr.mxu0 0.0
    %1458 = vmatpush2.msra.mxu0 0.0
    %1459 = vmatprep.subr.mxu0 0.0
    %1460 = vmatpush2.msra.mxu0 0.0
    %1461 = vmatprep.subr.mxu0 0.0
    %1462 = vmatpush2.msra.mxu0 0.0
    %1463 = vmatprep.subr.mxu0 0.0
    %1464 = vmatpush2.msra.mxu0 0.0
    %1465 = vmatprep.subr.mxu0 0.0
    %1466 = vmatpush2.msra.mxu0 0.0
    %1467 = vmatprep.subr.mxu0 0.0
    %1468 = vmatpush2.msra.mxu0 0.0
    %1469 = vmatprep.subr.mxu0 0.0
    %1470 = vmatpush2.msra.mxu0 0.0
    %1471 = vmatprep.subr.mxu0 0.0
    %1472 = vmatpush2.msra.mxu0 0.0
    %1473 = vmatprep.mubr.f32.mxu0 0.0
    %1474 = vmatmul.mubr.f32.gmra.mxu0 %v1407
    %v1475 = vpop.f32.mrf.mxu0
    %v1476 = vadd.f32 0.0, %v1475
    %v1477 = vpop.f32.mrf.mxu0
    %1478 = vdwg.mxu0
    %v1479 = vadd.f32 %v1405, %v1476
    %v1480 = vld [vmem:[%s4] sm:$0x1]
    %v1482 = vlaneseq
    %v1483 = vshrl.u32 %v1482, 7
    %v1484 = vsub.s32 0, %v1483
    %v1485 = vrot.slane %v1480, %v1484
    %v1487 = vadd.f32 %v1479, %v1485
    %v1488 = vmax.f32 %v1487, 0.0
    %v1489 = vld [vmem:[%s5] sm:$0xff]
    %v1490 = vld [vmem:[%s5 + $0x8] sm:$0xff]
    %v1491 = vld [vmem:[%s5 + $0x10] sm:$0xff]
    %v1492 = vld [vmem:[%s5 + $0x18] sm:$0xff]
    %v1493 = vld [vmem:[%s5 + $0x20] sm:$0xff]
    %v1494 = vld [vmem:[%s5 + $0x28] sm:$0xff]
    %v1495 = vld [vmem:[%s5 + $0x30] sm:$0xff]
    %v1496 = vld [vmem:[%s5 + $0x38] sm:$0xff]
    %v1497 = vld [vmem:[%s5 + $0x40] sm:$0xff]
    %v1498 = vld [vmem:[%s5 + $0x48] sm:$0xff]
    %v1499 = vld [vmem:[%s5 + $0x50] sm:$0xff]
    %v1500 = vld [vmem:[%s5 + $0x58] sm:$0xff]
    %v1501 = vld [vmem:[%s5 + $0x60] sm:$0xff]
    %v1502 = vld [vmem:[%s5 + $0x68] sm:$0xff]
    %v1503 = vld [vmem:[%s5 + $0x70] sm:$0xff]
    %v1504 = vld [vmem:[%s5 + $0x78] sm:$0xff]
    %v1505 = vld [vmem:[%s5 + $0x80] sm:$0xff]
    %v1506 = vld [vmem:[%s5 + $0x88] sm:$0xff]
    %v1507 = vld [vmem:[%s5 + $0x90] sm:$0xff]
    %v1508 = vld [vmem:[%s5 + $0x98] sm:$0xff]
    %v1509 = vld [vmem:[%s5 + $0xa0] sm:$0xff]
    %v1510 = vld [vmem:[%s5 + $0xa8] sm:$0xff]
    %v1511 = vld [vmem:[%s5 + $0xb0] sm:$0xff]
    %v1512 = vld [vmem:[%s5 + $0xb8] sm:$0xff]
    %v1513 = vld [vmem:[%s5 + $0xc0] sm:$0xff]
    %v1514 = vld [vmem:[%s5 + $0xc8] sm:$0xff]
    %v1515 = vld [vmem:[%s5 + $0xd0] sm:$0xff]
    %v1516 = vld [vmem:[%s5 + $0xd8] sm:$0xff]
    %v1517 = vld [vmem:[%s5 + $0xe0] sm:$0xff]
    %v1518 = vld [vmem:[%s5 + $0xe8] sm:$0xff]
    %v1519 = vld [vmem:[%s5 + $0xf0] sm:$0xff]
    %v1520 = vld [vmem:[%s5 + $0xf8] sm:$0xff]
    %v1522 = vrot.slane %v1488, 2
    %vm1523 = vcmask 261120
    %v1524 = vsel %vm1523, %v1522, 0
    %1526 = vmatprep.subr.mxu0 0.0
    %1527 = vmatpush1.msra.mxu0 0.0
    %1528 = vmatprep.subr.mxu0 0.0
    %1529 = vmatpush1.msra.mxu0 0.0
    %1530 = vmatprep.subr.mxu0 0.0
    %1531 = vmatpush1.msra.mxu0 0.0
    %1532 = vmatprep.subr.mxu0 0.0
    %1533 = vmatpush1.msra.mxu0 0.0
    %1534 = vmatprep.subr.mxu0 0.0
    %1535 = vmatpush1.msra.mxu0 0.0
    %1536 = vmatprep.subr.mxu0 0.0
    %1537 = vmatpush1.msra.mxu0 0.0
    %1538 = vmatprep.subr.mxu0 0.0
    %1539 = vmatpush1.msra.mxu0 0.0
    %1540 = vmatprep.subr.mxu0 0.0
    %1541 = vmatpush1.msra.mxu0 0.0
    %1542 = vmatprep.subr.mxu0 0.0
    %1543 = vmatpush1.msra.mxu0 0.0
    %1544 = vmatprep.subr.mxu0 0.0
    %1545 = vmatpush1.msra.mxu0 0.0
    %1546 = vmatprep.subr.mxu0 0.0
    %1547 = vmatpush1.msra.mxu0 0.0
    %1548 = vmatprep.subr.mxu0 0.0
    %1549 = vmatpush1.msra.mxu0 0.0
    %1550 = vmatprep.subr.mxu0 %v1504
    %1551 = vmatpush1.msra.mxu0 %v1503
    %1552 = vmatprep.subr.mxu0 %v1502
    %1553 = vmatpush1.msra.mxu0 %v1501
    %1554 = vmatprep.subr.mxu0 %v1500
    %1555 = vmatpush1.msra.mxu0 %v1499
    %1556 = vmatprep.subr.mxu0 %v1498
    %1557 = vmatpush1.msra.mxu0 %v1497
    %1558 = vmatprep.subr.mxu0 0.0
    %1559 = vmatpush2.msra.mxu0 0.0
    %1560 = vmatprep.subr.mxu0 0.0
    %1561 = vmatpush2.msra.mxu0 0.0
    %1562 = vmatprep.subr.mxu0 0.0
    %1563 = vmatpush2.msra.mxu0 0.0
    %1564 = vmatprep.subr.mxu0 0.0
    %1565 = vmatpush2.msra.mxu0 0.0
    %1566 = vmatprep.subr.mxu0 0.0
    %1567 = vmatpush2.msra.mxu0 0.0
    %1568 = vmatprep.subr.mxu0 0.0
    %1569 = vmatpush2.msra.mxu0 0.0
    %1570 = vmatprep.subr.mxu0 0.0
    %1571 = vmatpush2.msra.mxu0 0.0
    %1572 = vmatprep.subr.mxu0 0.0
    %1573 = vmatpush2.msra.mxu0 0.0
    %1574 = vmatprep.subr.mxu0 0.0
    %1575 = vmatpush2.msra.mxu0 0.0
    %1576 = vmatprep.subr.mxu0 0.0
    %1577 = vmatpush2.msra.mxu0 0.0
    %1578 = vmatprep.subr.mxu0 0.0
    %1579 = vmatpush2.msra.mxu0 0.0
    %1580 = vmatprep.subr.mxu0 0.0
    %1581 = vmatpush2.msra.mxu0 0.0
    %1582 = vmatprep.subr.mxu0 0.0
    %1583 = vmatpush2.msra.mxu0 0.0
    %1584 = vmatprep.subr.mxu0 0.0
    %1585 = vmatpush2.msra.mxu0 0.0
    %1586 = vmatprep.subr.mxu0 0.0
    %1587 = vmatpush2.msra.mxu0 0.0
    %1588 = vmatprep.subr.mxu0 0.0
    %1589 = vmatpush2.msra.mxu0 0.0
    %1590 = vmatprep.mubr.f32.mxu0 0.0
    %1591 = vmatmul.mubr.f32.gmra.mxu0 %v1524
    %v1592 = vpop.f32.mrf.mxu0
    %v1593 = vadd.f32 0.0, %v1592
    %v1594 = vpop.f32.mrf.mxu0
    %v1595 = vadd.f32 0.0, %v1594
    %1596 = vdwg.mxu0
    %v1597 = vsel %vm1523, %v1488, 0
    %1599 = vmatprep.subr.mxu0 0.0
    %1600 = vmatpush1.msra.mxu0 0.0
    %1601 = vmatprep.subr.mxu0 0.0
    %1602 = vmatpush1.msra.mxu0 0.0
    %1603 = vmatprep.subr.mxu0 0.0
    %1604 = vmatpush1.msra.mxu0 0.0
    %1605 = vmatprep.subr.mxu0 0.0
    %1606 = vmatpush1.msra.mxu0 0.0
    %1607 = vmatprep.subr.mxu0 0.0
    %1608 = vmatpush1.msra.mxu0 0.0
    %1609 = vmatprep.subr.mxu0 0.0
    %1610 = vmatpush1.msra.mxu0 0.0
    %1611 = vmatprep.subr.mxu0 0.0
    %1612 = vmatpush1.msra.mxu0 0.0
    %1613 = vmatprep.subr.mxu0 0.0
    %1614 = vmatpush1.msra.mxu0 0.0
    %1615 = vmatprep.subr.mxu0 0.0
    %1616 = vmatpush1.msra.mxu0 0.0
    %1617 = vmatprep.subr.mxu0 0.0
    %1618 = vmatpush1.msra.mxu0 0.0
    %1619 = vmatprep.subr.mxu0 0.0
    %1620 = vmatpush1.msra.mxu0 0.0
    %1621 = vmatprep.subr.mxu0 0.0
    %1622 = vmatpush1.msra.mxu0 0.0
    %1623 = vmatprep.subr.mxu0 %v1496
    %1624 = vmatpush1.msra.mxu0 %v1495
    %1625 = vmatprep.subr.mxu0 %v1494
    %1626 = vmatpush1.msra.mxu0 %v1493
    %1627 = vmatprep.subr.mxu0 %v1492
    %1628 = vmatpush1.msra.mxu0 %v1491
    %1629 = vmatprep.subr.mxu0 %v1490
    %1630 = vmatpush1.msra.mxu0 %v1489
    %1631 = vmatprep.subr.mxu0 0.0
    %1632 = vmatpush2.msra.mxu0 0.0
    %1633 = vmatprep.subr.mxu0 0.0
    %1634 = vmatpush2.msra.mxu0 0.0
    %1635 = vmatprep.subr.mxu0 0.0
    %1636 = vmatpush2.msra.mxu0 0.0
    %1637 = vmatprep.subr.mxu0 0.0
    %1638 = vmatpush2.msra.mxu0 0.0
    %1639 = vmatprep.subr.mxu0 0.0
    %1640 = vmatpush2.msra.mxu0 0.0
    %1641 = vmatprep.subr.mxu0 0.0
    %1642 = vmatpush2.msra.mxu0 0.0
    %1643 = vmatprep.subr.mxu0 0.0
    %1644 = vmatpush2.msra.mxu0 0.0
    %1645 = vmatprep.subr.mxu0 0.0
    %1646 = vmatpush2.msra.mxu0 0.0
    %1647 = vmatprep.subr.mxu0 0.0
    %1648 = vmatpush2.msra.mxu0 0.0
    %1649 = vmatprep.subr.mxu0 0.0
    %1650 = vmatpush2.msra.mxu0 0.0
    %1651 = vmatprep.subr.mxu0 0.0
    %1652 = vmatpush2.msra.mxu0 0.0
    %1653 = vmatprep.subr.mxu0 0.0
    %1654 = vmatpush2.msra.mxu0 0.0
    %1655 = vmatprep.subr.mxu0 0.0
    %1656 = vmatpush2.msra.mxu0 0.0
    %1657 = vmatprep.subr.mxu0 0.0
    %1658 = vmatpush2.msra.mxu0 0.0
    %1659 = vmatprep.subr.mxu0 0.0
    %1660 = vmatpush2.msra.mxu0 0.0
    %1661 = vmatprep.subr.mxu0 0.0
    %1662 = vmatpush2.msra.mxu0 0.0
    %1663 = vmatprep.mubr.f32.mxu0 0.0
    %1664 = vmatmul.mubr.f32.gmra.mxu0 %v1597
    %v1665 = vpop.f32.mrf.mxu0
    %v1666 = vadd.f32 %v1593, %v1665
    %v1667 = vpop.f32.mrf.mxu0
    %v1668 = vadd.f32 %v1595, %v1667
    %1669 = vdwg.mxu0
    %v1670 = vrot.slane %v1488, 4
    %v1671 = vsel %vm1523, %v1670, 0
    %1673 = vmatprep.subr.mxu0 0.0
    %1674 = vmatpush1.msra.mxu0 0.0
    %1675 = vmatprep.subr.mxu0 0.0
    %1676 = vmatpush1.msra.mxu0 0.0
    %1677 = vmatprep.subr.mxu0 0.0
    %1678 = vmatpush1.msra.mxu0 0.0
    %1679 = vmatprep.subr.mxu0 0.0
    %1680 = vmatpush1.msra.mxu0 0.0
    %1681 = vmatprep.subr.mxu0 0.0
    %1682 = vmatpush1.msra.mxu0 0.0
    %1683 = vmatprep.subr.mxu0 0.0
    %1684 = vmatpush1.msra.mxu0 0.0
    %1685 = vmatprep.subr.mxu0 0.0
    %1686 = vmatpush1.msra.mxu0 0.0
    %1687 = vmatprep.subr.mxu0 0.0
    %1688 = vmatpush1.msra.mxu0 0.0
    %1689 = vmatprep.subr.mxu0 0.0
    %1690 = vmatpush1.msra.mxu0 0.0
    %1691 = vmatprep.subr.mxu0 0.0
    %1692 = vmatpush1.msra.mxu0 0.0
    %1693 = vmatprep.subr.mxu0 0.0
    %1694 = vmatpush1.msra.mxu0 0.0
    %1695 = vmatprep.subr.mxu0 0.0
    %1696 = vmatpush1.msra.mxu0 0.0
    %1697 = vmatprep.subr.mxu0 %v1512
    %1698 = vmatpush1.msra.mxu0 %v1511
    %1699 = vmatprep.subr.mxu0 %v1510
    %1700 = vmatpush1.msra.mxu0 %v1509
    %1701 = vmatprep.subr.mxu0 %v1508
    %1702 = vmatpush1.msra.mxu0 %v1507
    %1703 = vmatprep.subr.mxu0 %v1506
    %1704 = vmatpush1.msra.mxu0 %v1505
    %1705 = vmatprep.subr.mxu0 0.0
    %1706 = vmatpush2.msra.mxu0 0.0
    %1707 = vmatprep.subr.mxu0 0.0
    %1708 = vmatpush2.msra.mxu0 0.0
    %1709 = vmatprep.subr.mxu0 0.0
    %1710 = vmatpush2.msra.mxu0 0.0
    %1711 = vmatprep.subr.mxu0 0.0
    %1712 = vmatpush2.msra.mxu0 0.0
    %1713 = vmatprep.subr.mxu0 0.0
    %1714 = vmatpush2.msra.mxu0 0.0
    %1715 = vmatprep.subr.mxu0 0.0
    %1716 = vmatpush2.msra.mxu0 0.0
    %1717 = vmatprep.subr.mxu0 0.0
    %1718 = vmatpush2.msra.mxu0 0.0
    %1719 = vmatprep.subr.mxu0 0.0
    %1720 = vmatpush2.msra.mxu0 0.0
    %1721 = vmatprep.subr.mxu0 0.0
    %1722 = vmatpush2.msra.mxu0 0.0
    %1723 = vmatprep.subr.mxu0 0.0
    %1724 = vmatpush2.msra.mxu0 0.0
    %1725 = vmatprep.subr.mxu0 0.0
    %1726 = vmatpush2.msra.mxu0 0.0
    %1727 = vmatprep.subr.mxu0 0.0
    %1728 = vmatpush2.msra.mxu0 0.0
    %1729 = vmatprep.subr.mxu0 0.0
    %1730 = vmatpush2.msra.mxu0 0.0
    %1731 = vmatprep.subr.mxu0 0.0
    %1732 = vmatpush2.msra.mxu0 0.0
    %1733 = vmatprep.subr.mxu0 0.0
    %1734 = vmatpush2.msra.mxu0 0.0
    %1735 = vmatprep.subr.mxu0 0.0
    %1736 = vmatpush2.msra.mxu0 0.0
    %1737 = vmatprep.mubr.f32.mxu0 0.0
    %1738 = vmatmul.mubr.f32.gmra.mxu0 %v1671
    %v1739 = vpop.f32.mrf.mxu0
    %v1740 = vadd.f32 0.0, %v1739
    %v1741 = vpop.f32.mrf.mxu0
    %v1742 = vadd.f32 0.0, %v1741
    %1743 = vdwg.mxu0
    %v1744 = vadd.f32 %v1666, %v1740
    %v1745 = vadd.f32 %v1668, %v1742
    %v1746 = vrot.slane %v1488, 6
    %v1747 = vsel %vm1523, %v1746, 0
    %1749 = vmatprep.subr.mxu0 0.0
    %1750 = vmatpush1.msra.mxu0 0.0
    %1751 = vmatprep.subr.mxu0 0.0
    %1752 = vmatpush1.msra.mxu0 0.0
    %1753 = vmatprep.subr.mxu0 0.0
    %1754 = vmatpush1.msra.mxu0 0.0
    %1755 = vmatprep.subr.mxu0 0.0
    %1756 = vmatpush1.msra.mxu0 0.0
    %1757 = vmatprep.subr.mxu0 0.0
    %1758 = vmatpush1.msra.mxu0 0.0
    %1759 = vmatprep.subr.mxu0 0.0
    %1760 = vmatpush1.msra.mxu0 0.0
    %1761 = vmatprep.subr.mxu0 0.0
    %1762 = vmatpush1.msra.mxu0 0.0
    %1763 = vmatprep.subr.mxu0 0.0
    %1764 = vmatpush1.msra.mxu0 0.0
    %1765 = vmatprep.subr.mxu0 0.0
    %1766 = vmatpush1.msra.mxu0 0.0
    %1767 = vmatprep.subr.mxu0 0.0
    %1768 = vmatpush1.msra.mxu0 0.0
    %1769 = vmatprep.subr.mxu0 0.0
    %1770 = vmatpush1.msra.mxu0 0.0
    %1771 = vmatprep.subr.mxu0 0.0
    %1772 = vmatpush1.msra.mxu0 0.0
    %1773 = vmatprep.subr.mxu0 %v1520
    %1774 = vmatpush1.msra.mxu0 %v1519
    %1775 = vmatprep.subr.mxu0 %v1518
    %1776 = vmatpush1.msra.mxu0 %v1517
    %1777 = vmatprep.subr.mxu0 %v1516
    %1778 = vmatpush1.msra.mxu0 %v1515
    %1779 = vmatprep.subr.mxu0 %v1514
    %1780 = vmatpush1.msra.mxu0 %v1513
    %1781 = vmatprep.subr.mxu0 0.0
    %1782 = vmatpush2.msra.mxu0 0.0
    %1783 = vmatprep.subr.mxu0 0.0
    %1784 = vmatpush2.msra.mxu0 0.0
    %1785 = vmatprep.subr.mxu0 0.0
    %1786 = vmatpush2.msra.mxu0 0.0
    %1787 = vmatprep.subr.mxu0 0.0
    %1788 = vmatpush2.msra.mxu0 0.0
    %1789 = vmatprep.subr.mxu0 0.0
    %1790 = vmatpush2.msra.mxu0 0.0
    %1791 = vmatprep.subr.mxu0 0.0
    %1792 = vmatpush2.msra.mxu0 0.0
    %1793 = vmatprep.subr.mxu0 0.0
    %1794 = vmatpush2.msra.mxu0 0.0
    %1795 = vmatprep.subr.mxu0 0.0
    %1796 = vmatpush2.msra.mxu0 0.0
    %1797 = vmatprep.subr.mxu0 0.0
    %1798 = vmatpush2.msra.mxu0 0.0
    %1799 = vmatprep.subr.mxu0 0.0
    %1800 = vmatpush2.msra.mxu0 0.0
    %1801 = vmatprep.subr.mxu0 0.0
    %1802 = vmatpush2.msra.mxu0 0.0
    %1803 = vmatprep.subr.mxu0 0.0
    %1804 = vmatpush2.msra.mxu0 0.0
    %1805 = vmatprep.subr.mxu0 0.0
    %1806 = vmatpush2.msra.mxu0 0.0
    %1807 = vmatprep.subr.mxu0 0.0
    %1808 = vmatpush2.msra.mxu0 0.0
    %1809 = vmatprep.subr.mxu0 0.0
    %1810 = vmatpush2.msra.mxu0 0.0
    %1811 = vmatprep.subr.mxu0 0.0
    %1812 = vmatpush2.msra.mxu0 0.0
    %1813 = vmatprep.mubr.f32.mxu0 0.0
    %1814 = vmatmul.mubr.f32.gmra.mxu0 %v1747
    %v1815 = vpop.f32.mrf.mxu0
    %v1816 = vadd.f32 0.0, %v1815
    %v1817 = vpop.f32.mrf.mxu0
    %v1818 = vadd.f32 0.0, %v1817
    %1819 = vdwg.mxu0
    %v1820 = vadd.f32 %v1744, %v1816
    %v1821 = vadd.f32 %v1745, %v1818
    %v1822 = vld [vmem:[%s6] sm:$0x3]
    %v1824 = vlaneseq
    %v1825 = vshrl.u32 %v1824, 7
    %v1826 = vsub.s32 0, %v1825
    %v1827 = vrot.slane %v1822, %v1826
    %v1828 = vlaneseq
    %v1829 = vshrl.u32 %v1828, 7
    %v1830 = vsub.s32 1, %v1829
    %v1831 = vrot.slane %v1822, %v1830
    %v1834 = vadd.f32 %v1820, %v1827
    %v1835 = vadd.f32 %v1821, %v1831
    %v1836 = vmax.f32 %v1834, 0.0
    %v1837 = vmax.f32 %v1835, 0.0
    %v1838 = vld [vmem:[%s7] sm:$0xff]
    %v1839 = vld [vmem:[%s7 + $0x8] sm:$0xff]
    %v1840 = vld [vmem:[%s7 + $0x10] sm:$0xff]
    %v1841 = vld [vmem:[%s7 + $0x18] sm:$0xff]
    %v1842 = vld [vmem:[%s7 + $0x20] sm:$0xff]
    %v1843 = vld [vmem:[%s7 + $0x28] sm:$0xff]
    %v1844 = vld [vmem:[%s7 + $0x30] sm:$0xff]
    %v1845 = vld [vmem:[%s7 + $0x38] sm:$0xff]
    %v1846 = vld [vmem:[%s7 + $0x40] sm:$0xff]
    %v1847 = vld [vmem:[%s7 + $0x48] sm:$0xff]
    %v1848 = vld [vmem:[%s7 + $0x50] sm:$0xff]
    %v1849 = vld [vmem:[%s7 + $0x58] sm:$0xff]
    %v1850 = vld [vmem:[%s7 + $0x60] sm:$0xff]
    %v1851 = vld [vmem:[%s7 + $0x68] sm:$0xff]
    %v1852 = vld [vmem:[%s7 + $0x70] sm:$0xff]
    %v1853 = vld [vmem:[%s7 + $0x78] sm:$0xff]
    %v1854 = vld [vmem:[%s7 + $0x80] sm:$0xff]
    %v1855 = vld [vmem:[%s7 + $0x88] sm:$0xff]
    %v1856 = vld [vmem:[%s7 + $0x90] sm:$0xff]
    %v1857 = vld [vmem:[%s7 + $0x98] sm:$0xff]
    %v1858 = vld [vmem:[%s7 + $0xa0] sm:$0xff]
    %v1859 = vld [vmem:[%s7 + $0xa8] sm:$0xff]
    %v1860 = vld [vmem:[%s7 + $0xb0] sm:$0xff]
    %v1861 = vld [vmem:[%s7 + $0xb8] sm:$0xff]
    %v1862 = vld [vmem:[%s7 + $0xc0] sm:$0xff]
    %v1863 = vld [vmem:[%s7 + $0xc8] sm:$0xff]
    %v1864 = vld [vmem:[%s7 + $0xd0] sm:$0xff]
    %v1865 = vld [vmem:[%s7 + $0xd8] sm:$0xff]
    %v1866 = vld [vmem:[%s7 + $0xe0] sm:$0xff]
    %v1867 = vld [vmem:[%s7 + $0xe8] sm:$0xff]
    %v1868 = vld [vmem:[%s7 + $0xf0] sm:$0xff]
    %v1869 = vld [vmem:[%s7 + $0xf8] sm:$0xff]
    %v1870 = vld [vmem:[%s8] sm:$0x1]
    %v1872 = vlaneseq
    %v1873 = vshrl.u32 %v1872, 7
    %v1874 = vsub.s32 0, %v1873
    %v1875 = vrot.slane %v1870, %v1874
    %1877 = vmatprep.subr.mxu0 0.0
    %1878 = vmatpush1.msra.mxu0 %v1853
    %1879 = vmatprep.subr.mxu0 0.0
    %1880 = vmatpush1.msra.mxu0 %v1852
    %1881 = vmatprep.subr.mxu0 0.0
    %1882 = vmatpush1.msra.mxu0 %v1851
    %1883 = vmatprep.subr.mxu0 0.0
    %1884 = vmatpush1.msra.mxu0 %v1850
    %1885 = vmatprep.subr.mxu0 0.0
    %1886 = vmatpush1.msra.mxu0 %v1849
    %1887 = vmatprep.subr.mxu0 0.0
    %1888 = vmatpush1.msra.mxu0 %v1848
    %1889 = vmatprep.subr.mxu0 0.0
    %1890 = vmatpush1.msra.mxu0 %v1847
    %1891 = vmatprep.subr.mxu0 0.0
    %1892 = vmatpush1.msra.mxu0 %v1846
    %1893 = vmatprep.subr.mxu0 0.0
    %1894 = vmatpush1.msra.mxu0 %v1845
    %1895 = vmatprep.subr.mxu0 0.0
    %1896 = vmatpush1.msra.mxu0 %v1844
    %1897 = vmatprep.subr.mxu0 0.0
    %1898 = vmatpush1.msra.mxu0 %v1843
    %1899 = vmatprep.subr.mxu0 0.0
    %1900 = vmatpush1.msra.mxu0 %v1842
    %1901 = vmatprep.subr.mxu0 0.0
    %1902 = vmatpush1.msra.mxu0 %v1841
    %1903 = vmatprep.subr.mxu0 0.0
    %1904 = vmatpush1.msra.mxu0 %v1840
    %1905 = vmatprep.subr.mxu0 0.0
    %1906 = vmatpush1.msra.mxu0 %v1839
    %1907 = vmatprep.subr.mxu0 0.0
    %1908 = vmatpush1.msra.mxu0 %v1838
    %1909 = vmatprep.subr.mxu0 0.0
    %1910 = vmatpush2.msra.mxu0 %v1869
    %1911 = vmatprep.subr.mxu0 0.0
    %1912 = vmatpush2.msra.mxu0 %v1868
    %1913 = vmatprep.subr.mxu0 0.0
    %1914 = vmatpush2.msra.mxu0 %v1867
    %1915 = vmatprep.subr.mxu0 0.0
    %1916 = vmatpush2.msra.mxu0 %v1866
    %1917 = vmatprep.subr.mxu0 0.0
    %1918 = vmatpush2.msra.mxu0 %v1865
    %1919 = vmatprep.subr.mxu0 0.0
    %1920 = vmatpush2.msra.mxu0 %v1864
    %1921 = vmatprep.subr.mxu0 0.0
    %1922 = vmatpush2.msra.mxu0 %v1863
    %1923 = vmatprep.subr.mxu0 0.0
    %1924 = vmatpush2.msra.mxu0 %v1862
    %1925 = vmatprep.subr.mxu0 0.0
    %1926 = vmatpush2.msra.mxu0 %v1861
    %1927 = vmatprep.subr.mxu0 0.0
    %1928 = vmatpush2.msra.mxu0 %v1860
    %1929 = vmatprep.subr.mxu0 0.0
    %1930 = vmatpush2.msra.mxu0 %v1859
    %1931 = vmatprep.subr.mxu0 0.0
    %1932 = vmatpush2.msra.mxu0 %v1858
    %1933 = vmatprep.subr.mxu0 0.0
    %1934 = vmatpush2.msra.mxu0 %v1857
    %1935 = vmatprep.subr.mxu0 0.0
    %1936 = vmatpush2.msra.mxu0 %v1856
    %1937 = vmatprep.subr.mxu0 0.0
    %1938 = vmatpush2.msra.mxu0 %v1855
    %1939 = vmatprep.subr.mxu0 0.0
    %1940 = vmatpush2.msra.mxu0 %v1854
    %1941 = vmatprep.mubr.f32.mxu0 %v1837
    %1942 = vmatmul.mubr.f32.gmra.mxu0 %v1836
    %v1943 = vpop.f32.mrf.mxu0
    %v1944 = vadd.f32 %v1875, %v1943
    %v1945 = vpop.f32.mrf.mxu0
    %1946 = vdwg.mxu0
    %1947 = vst [vmem:[#allocation2] sm:$0x3] %v1944
    // Predicated region
    $region38: #{dqn_cnn_forward.1} parent=1 // pred_check
      _
    $region39: #{dqn_cnn_forward.1} parent=1 // pred_check_branch
      %1949 = sbr.rel (0) target = $region41
    $region40: #{dqn_cnn_forward.1} parent=1 // pred_region
      %s1951 = ssub.s32 32, 32
      %1952 = vsyncadd [#allocation3], %s1951
      %s1954 = sshll.u32 [#allocation2], 4
      %s1955 = int_to_ptr.vmem [resolvable:$true] %s1954
      %1957 = dma.vmem_to_hbm [thread:$0]  %s1955, 32, %s9, [#allocation3]
    $region41: #{dqn_cnn_forward.1} parent=1 // pred_fallthru
      _
    // Predicated region
    $region42: #{dqn_cnn_forward.1} parent=1 // pred_check
      _
    $region43: #{dqn_cnn_forward.1} parent=1 // pred_check_branch
      %1959 = sbr.rel (0) target = $region45
    $region44: #{dqn_cnn_forward.1} parent=1 // pred_region
      %1960 = dma.done [#allocation3], 32
    $region45: #{dqn_cnn_forward.1} parent=1 // pred_fallthru
      _
    %1961 = vsyncpa [#allocation3], 1

</llo_original>
